<compile_context>
chip_gen: v7x
topology: tpu7x:2x2x1
jax: 0.10.0
libtpu: 0.0.40
codegen_flags: <defaults>
</compile_context>

<pallas_src>
import functools

import jax
import jax.numpy as jnp
from jax.experimental import pallas as pl
from jax.experimental.pallas import tpu as pltpu


# ----------------------------- fused Pallas kernels -----------------------------

def _block1_kernel(x_ref, sc_ref, sh_ref, wqkv_ref, bqkv_ref, wo_ref, bo_ref, g_ref,
                   o_ref, *, heads, c1, c2, apply_shortcut):
    """x + gamma1 * OutProj(MHSA(QKVProj(BN(x)))) for one batch, fully in VMEM."""
    dh = c1 // heads
    dv = c2 // heads
    scale = float(dh) ** -0.5

    x = x_ref[...]                                            # (N, C1) f32
    xn = x * sc_ref[...] + sh_ref[...]                        # folded BN (inference)
    qkv = jnp.dot(xn.astype(jnp.bfloat16), wqkv_ref[...],
                  preferred_element_type=jnp.float32) + bqkv_ref[...]   # (N, 2*C1 + C2)

    outs = []
    for h in range(heads):                                    # heads is small & static
        q = qkv[:, h * dh:(h + 1) * dh].astype(jnp.bfloat16)
        k = qkv[:, c1 + h * dh:c1 + (h + 1) * dh].astype(jnp.bfloat16)
        v = qkv[:, 2 * c1 + h * dv:2 * c1 + (h + 1) * dv].astype(jnp.bfloat16)
        s = jnp.einsum('qd,kd->qk', q, k,
                       preferred_element_type=jnp.float32) * scale      # (N, N) f32
        s = s - jnp.max(s, axis=-1, keepdims=True)
        p = jnp.exp(s)
        l = jnp.sum(p, axis=-1, keepdims=True)
        o_h = jnp.dot(p.astype(jnp.bfloat16), v, preferred_element_type=jnp.float32)
        outs.append(o_h * pl.reciprocal(l, approx=True))      # scale O(N*dv), EUP recip
    attn = outs[0] if heads == 1 else jnp.concatenate(outs, axis=-1)    # (N, C2)

    y = jnp.dot(attn.astype(jnp.bfloat16), wo_ref[...],
                preferred_element_type=jnp.float32) + bo_ref[...]
    y = g_ref[...] * y
    if apply_shortcut:
        y = x + y
    o_ref[...] = y


def _block2_kernel(y_ref, sc_ref, sh_ref, w1_ref, b1_ref, dww_ref, dwb_ref,
                   w2_ref, b2_ref, g_ref, o_ref, pad_ref, *, H, W, ksize, fc):
    """y + gamma2 * Project(gelu(DWConv(gelu(Expand(BN(y)))))) for one batch."""
    p = ksize // 2

    y = y_ref[...]                                            # (N, C2) f32
    xn = y * sc_ref[...] + sh_ref[...]                        # folded BN (inference)
    h1 = jnp.dot(xn.astype(jnp.bfloat16), w1_ref[...],
                 preferred_element_type=jnp.float32) + b1_ref[...]      # (N, fc)
    h1 = jax.nn.gelu(h1)

    # In-VMEM zero padding for the depthwise conv (no HBM pad round-trip).
    pad_ref[...] = jnp.zeros_like(pad_ref)
    pad_ref[p:p + H, p:p + W, :] = h1.reshape(H, W, fc)

    w = dww_ref[...]                                          # (k, k, fc) loaded once
    acc = jnp.zeros((H, W, fc), jnp.float32)
    for dy in range(ksize):
        for dx in range(ksize):
            acc = acc + pad_ref[dy:dy + H, dx:dx + W, :] * w[dy:dy + 1, dx:dx + 1, :]
    d = jax.nn.gelu(acc + dwb_ref[...])                       # (H, W, fc)

    out = jnp.dot(d.reshape(H * W, fc).astype(jnp.bfloat16), w2_ref[...],
                  preferred_element_type=jnp.float32) + b2_ref[...]
    o_ref[...] = y + g_ref[...] * out


# ----------------------------- Pallas wrappers -----------------------------

def _block1(x2d, params, *, B, N, heads, c1, c2, apply_shortcut):
    cqkv = 2 * c1 + c2
    kernel = functools.partial(_block1_kernel, heads=heads, c1=c1, c2=c2,
                               apply_shortcut=apply_shortcut)
    return pl.pallas_call(
        kernel,
        out_shape=jax.ShapeDtypeStruct((B * N, c2), jnp.float32),
        grid=(B,),
        in_specs=[
            pl.BlockSpec((N, c1), lambda i: (i, 0)),
            pl.BlockSpec((1, c1), lambda i: (0, 0)),
            pl.BlockSpec((1, c1), lambda i: (0, 0)),
            pl.BlockSpec((c1, cqkv), lambda i: (0, 0)),
            pl.BlockSpec((1, cqkv), lambda i: (0, 0)),
            pl.BlockSpec((c2, c2), lambda i: (0, 0)),
            pl.BlockSpec((1, c2), lambda i: (0, 0)),
            pl.BlockSpec((1, c2), lambda i: (0, 0)),
        ],
        out_specs=pl.BlockSpec((N, c2), lambda i: (i, 0)),
        compiler_params=pltpu.CompilerParams(dimension_semantics=("parallel",)),
    )(x2d,
      params["bn1_scale"].reshape(1, -1), params["bn1_shift"].reshape(1, -1),
      params["wqkv"], params["bqkv"].reshape(1, -1),
      params["wo"], params["bo"].reshape(1, -1),
      params["gamma1"].reshape(1, -1))


def _block2(y2d, params, *, B, H, W, ksize, c2, fc):
    N = H * W
    p = ksize // 2
    kernel = functools.partial(_block2_kernel, H=H, W=W, ksize=ksize, fc=fc)
    return pl.pallas_call(
        kernel,
        out_shape=jax.ShapeDtypeStruct((B * N, c2), jnp.float32),
        grid=(B,),
        in_specs=[
            pl.BlockSpec((N, c2), lambda i: (i, 0)),
            pl.BlockSpec((1, c2), lambda i: (0, 0)),
            pl.BlockSpec((1, c2), lambda i: (0, 0)),
            pl.BlockSpec((c2, fc), lambda i: (0, 0)),
            pl.BlockSpec((1, fc), lambda i: (0, 0)),
            pl.BlockSpec((ksize, ksize, fc), lambda i: (0, 0, 0)),
            pl.BlockSpec((1, 1, fc), lambda i: (0, 0, 0)),
            pl.BlockSpec((fc, c2), lambda i: (0, 0)),
            pl.BlockSpec((1, c2), lambda i: (0, 0)),
            pl.BlockSpec((1, c2), lambda i: (0, 0)),
        ],
        out_specs=pl.BlockSpec((N, c2), lambda i: (i, 0)),
        scratch_shapes=[pltpu.VMEM((H + 2 * p, W + 2 * p, fc), jnp.float32)],
        compiler_params=pltpu.CompilerParams(dimension_semantics=("parallel",)),
    )(y2d,
      params["bn2_scale"].reshape(1, -1), params["bn2_shift"].reshape(1, -1),
      params["w1"], params["b1"].reshape(1, -1),
      params["dw_w"], params["dw_b"].reshape(1, 1, -1),
      params["w2"], params["b2"].reshape(1, -1),
      params["gamma2"].reshape(1, -1))


# ----------------------------- parameter init -----------------------------

def _folded_bn(keys, c, eps=1e-5):
    gamma = 1.0 + 0.05 * jax.random.normal(keys[0], (c,), jnp.float32)
    beta = 0.05 * jax.random.normal(keys[1], (c,), jnp.float32)
    mean = 0.05 * jax.random.normal(keys[2], (c,), jnp.float32)
    var = 1.0 + jnp.abs(0.05 * jax.random.normal(keys[3], (c,), jnp.float32))
    scale = gamma / jnp.sqrt(var + eps)
    shift = beta - mean * scale
    return scale, shift


def init_params(key, c1, c2, heads, ksize, f):
    ks = jax.random.split(key, 24)
    fc = f * c2

    def nrm(kk, shape, s=0.1):
        return s * jax.random.normal(kk, shape, jnp.float32)

    bn1_scale, bn1_shift = _folded_bn(ks[0:4], c1)
    bn2_scale, bn2_shift = _folded_bn(ks[4:8], c2)

    wq = nrm(ks[8], (c1, c1))
    wk = nrm(ks[9], (c1, c1))
    wv = nrm(ks[10], (c1, c2))
    bq = nrm(ks[11], (c1,))
    bk = nrm(ks[12], (c1,))
    bv = nrm(ks[13], (c2,))

    bf16 = jnp.bfloat16
    return {
        "bn1_scale": bn1_scale, "bn1_shift": bn1_shift,
        # MXU weights stored in bf16 (halves HBM traffic, full MXU throughput);
        # biases / BN / gamma / depthwise (VPU) weights stay f32.
        "wqkv": jnp.concatenate([wq, wk, wv], axis=1).astype(bf16),
        "bqkv": jnp.concatenate([bq, bk, bv], axis=0),
        "wo": nrm(ks[14], (c2, c2)).astype(bf16), "bo": nrm(ks[15], (c2,)),
        "gamma1": jnp.full((c2,), 0.5, jnp.float32),
        "bn2_scale": bn2_scale, "bn2_shift": bn2_shift,
        "w1": nrm(ks[16], (c2, fc)).astype(bf16), "b1": nrm(ks[17], (fc,)),
        "dw_w": nrm(ks[18], (ksize, ksize, fc)), "dw_b": nrm(ks[19], (fc,)),
        "w2": nrm(ks[20], (fc, c2)).astype(bf16), "b2": nrm(ks[21], (c2,)),
        "gamma2": jnp.full((c2,), 0.5, jnp.float32),
    }


# ----------------------------- forward pass -----------------------------

def transformer_encoder_convlike(x_nchw, params, *, heads, ksize, s=1):
    B, C1, H, W = x_nchw.shape
    C2 = params["wo"].shape[1]
    fc = params["w1"].shape[1]
    N = H * W
    apply_shortcut = (s == 1) and (C1 == C2)

    # One layout change at the boundary: NCHW -> flat (B*N, C) tokens.
    x2d = jnp.transpose(x_nchw, (0, 2, 3, 1)).astype(jnp.float32).reshape(B * N, C1)

    # block 1: ScaledResidual(pre-norm BN + ConvLikeAttention)   (fused, 1 pallas_call)
    y2d = _block1(x2d, params, B=B, N=N, heads=heads, c1=C1, c2=C2,
                  apply_shortcut=apply_shortcut)

    # block 2: ScaledResidual(BN + LightBottleneckLayer)         (fused, 1 pallas_call)
    out2d = _block2(y2d, params, B=B, H=H, W=W, ksize=ksize, c2=C2, fc=fc)

    return jnp.transpose(out2d.reshape(B, H, W, C2), (0, 3, 1, 2))  # back to NCHW


# ----------------------------- demo -----------------------------

if __name__ == "__main__":
    key = jax.random.PRNGKey(0)
    k_x, k_p = jax.random.split(key)

    B, C1, H, W = 2, 16, 8, 8
    C2, heads, ksize, f = 16, 2, 3, 2

    x = jax.random.normal(k_x, (B, C1, H, W), jnp.float32)
    params = init_params(k_p, C1, C2, heads, ksize, f)

    fwd = jax.jit(functools.partial(transformer_encoder_convlike,
                                    heads=heads, ksize=ksize, s=1))
    out = fwd(x, params)
    jax.block_until_ready(out)
    assert out.shape == (B, C2, H, W), out.shape
    assert jnp.all(jnp.isfinite(out))
    print("KERNEL_OK")
</pallas_src>

<mosaic_0001>
module attributes {stable_mosaic.version = 11 : i64} {
  func.func @_block1_kernel(%arg0: i32, %arg1: memref<64x16xf32, #tpu.memory_space<vmem>>, %arg2: memref<1x16xf32, #tpu.memory_space<vmem>>, %arg3: memref<1x16xf32, #tpu.memory_space<vmem>>, %arg4: memref<16x48xbf16, #tpu.memory_space<vmem>>, %arg5: memref<1x48xf32, #tpu.memory_space<vmem>>, %arg6: memref<16x16xbf16, #tpu.memory_space<vmem>>, %arg7: memref<1x16xf32, #tpu.memory_space<vmem>>, %arg8: memref<1x16xf32, #tpu.memory_space<vmem>>, %arg9: memref<64x16xf32, #tpu.memory_space<vmem>>) attributes {dimension_semantics = [#tpu.dimension_semantics<parallel>], iteration_bounds = array<i64: 2>, scalar_prefetch = 0 : i64, scratch_operands = 0 : i64, tpu.core_type = #tpu.core_type<tc>, window_params = [{transform_indices = @transform_0, window_bounds = array<i64: 64, 16>}, {pipeline_mode = #tpu.pipeline_mode<synchronous>, transform_indices = @transform_1, window_bounds = array<i64: 1, 16>}, {pipeline_mode = #tpu.pipeline_mode<synchronous>, transform_indices = @transform_2, window_bounds = array<i64: 1, 16>}, {pipeline_mode = #tpu.pipeline_mode<synchronous>, transform_indices = @transform_3, window_bounds = array<i64: 16, 48>}, {pipeline_mode = #tpu.pipeline_mode<synchronous>, transform_indices = @transform_4, window_bounds = array<i64: 1, 48>}, {pipeline_mode = #tpu.pipeline_mode<synchronous>, transform_indices = @transform_5, window_bounds = array<i64: 16, 16>}, {pipeline_mode = #tpu.pipeline_mode<synchronous>, transform_indices = @transform_6, window_bounds = array<i64: 1, 16>}, {pipeline_mode = #tpu.pipeline_mode<synchronous>, transform_indices = @transform_7, window_bounds = array<i64: 1, 16>}, {transform_indices = @transform_8, window_bounds = array<i64: 64, 16>}]} {
    %c0 = arith.constant 0 : index
    %c0_0 = arith.constant 0 : index
    %0 = vector.load %arg1[%c0, %c0_0] : memref<64x16xf32, #tpu.memory_space<vmem>>, vector<64x16xf32>
    %c0_1 = arith.constant 0 : index
    %c0_2 = arith.constant 0 : index
    %1 = vector.load %arg2[%c0_1, %c0_2] : memref<1x16xf32, #tpu.memory_space<vmem>>, vector<1x16xf32>
    %2 = vector.broadcast %1 : vector<1x16xf32> to vector<64x16xf32>
    %3 = arith.mulf %0, %2 : vector<64x16xf32>
    %c0_3 = arith.constant 0 : index
    %c0_4 = arith.constant 0 : index
    %4 = vector.load %arg3[%c0_3, %c0_4] : memref<1x16xf32, #tpu.memory_space<vmem>>, vector<1x16xf32>
    %5 = vector.broadcast %4 : vector<1x16xf32> to vector<64x16xf32>
    %6 = arith.addf %3, %5 : vector<64x16xf32>
    %7 = arith.truncf %6 : vector<64x16xf32> to vector<64x16xbf16>
    %c0_5 = arith.constant 0 : index
    %c0_6 = arith.constant 0 : index
    %8 = vector.load %arg4[%c0_5, %c0_6] : memref<16x48xbf16, #tpu.memory_space<vmem>>, vector<16x48xbf16>
    %cst = arith.constant dense<0.000000e+00> : vector<64x48xf32>
    %9 = tpu.matmul %7, %8, %cst {dimension_numbers = #tpu.dot_dimension_numbers<[1], [0], [0], [1], [0, 0, 1, 1], [], []>} : vector<64x16xbf16>, vector<16x48xbf16>, vector<64x48xf32> -> vector<64x48xf32>
    %c0_7 = arith.constant 0 : index
    %c0_8 = arith.constant 0 : index
    %10 = vector.load %arg5[%c0_7, %c0_8] : memref<1x48xf32, #tpu.memory_space<vmem>>, vector<1x48xf32>
    %11 = vector.broadcast %10 : vector<1x48xf32> to vector<64x48xf32>
    %12 = arith.addf %9, %11 : vector<64x48xf32>
    %13 = vector.extract_strided_slice %12 {offsets = [0, 0], sizes = [64, 8], strides = [1, 1]} : vector<64x48xf32> to vector<64x8xf32>
    %14 = arith.truncf %13 : vector<64x8xf32> to vector<64x8xbf16>
    %15 = vector.extract_strided_slice %12 {offsets = [0, 16], sizes = [64, 8], strides = [1, 1]} : vector<64x48xf32> to vector<64x8xf32>
    %16 = arith.truncf %15 : vector<64x8xf32> to vector<64x8xbf16>
    %17 = vector.extract_strided_slice %12 {offsets = [0, 32], sizes = [64, 8], strides = [1, 1]} : vector<64x48xf32> to vector<64x8xf32>
    %18 = arith.truncf %17 : vector<64x8xf32> to vector<64x8xbf16>
    "tpu.trace_start"() <{level = 10 : i32, message = "qd,kd->qk"}> : () -> ()
    %cst_9 = arith.constant dense<0.000000e+00> : vector<64x64xf32>
    %19 = tpu.matmul %14, %16, %cst_9 {dimension_numbers = #tpu.dot_dimension_numbers<[1], [1], [0], [0], [0, 0, 1, 0], [], []>} : vector<64x8xbf16>, vector<64x8xbf16>, vector<64x64xf32> -> vector<64x64xf32>
    "tpu.trace_stop"() : () -> ()
    %cst_10 = arith.constant 0.353553385 : f32
    %20 = vector.broadcast %cst_10 : f32 to vector<64x64xf32>
    %21 = arith.mulf %19, %20 : vector<64x64xf32>
    %cst_11 = arith.constant dense<0xFF800000> : vector<64xf32>
    %22 = vector.multi_reduction <maximumf>, %21, %cst_11 [1] : vector<64x64xf32> to vector<64xf32>
    %23 = vector.shape_cast %22 : vector<64xf32> to vector<64x1xf32>
    %24 = vector.broadcast %23 : vector<64x1xf32> to vector<64x64xf32>
    %25 = arith.subf %21, %24 : vector<64x64xf32>
    %26 = math.exp %25 : vector<64x64xf32>
    %cst_12 = arith.constant dense<0.000000e+00> : vector<64xf32>
    %27 = vector.multi_reduction <add>, %26, %cst_12 [1] : vector<64x64xf32> to vector<64xf32>
    %28 = vector.shape_cast %27 : vector<64xf32> to vector<64x1xf32>
    %29 = arith.truncf %26 : vector<64x64xf32> to vector<64x64xbf16>
    %cst_13 = arith.constant dense<0.000000e+00> : vector<64x8xf32>
    %30 = tpu.matmul %29, %18, %cst_13 {dimension_numbers = #tpu.dot_dimension_numbers<[1], [0], [0], [1], [0, 0, 1, 1], [], []>} : vector<64x64xbf16>, vector<64x8xbf16>, vector<64x8xf32> -> vector<64x8xf32>
    %31 = tpu.reciprocal %28 {approx = true} : vector<64x1xf32> -> vector<64x1xf32>
    %32 = vector.broadcast %31 : vector<64x1xf32> to vector<64x8xf32>
    %33 = arith.mulf %30, %32 : vector<64x8xf32>
    %34 = vector.extract_strided_slice %12 {offsets = [0, 8], sizes = [64, 8], strides = [1, 1]} : vector<64x48xf32> to vector<64x8xf32>
    %35 = arith.truncf %34 : vector<64x8xf32> to vector<64x8xbf16>
    %36 = vector.extract_strided_slice %12 {offsets = [0, 24], sizes = [64, 8], strides = [1, 1]} : vector<64x48xf32> to vector<64x8xf32>
    %37 = arith.truncf %36 : vector<64x8xf32> to vector<64x8xbf16>
    %38 = vector.extract_strided_slice %12 {offsets = [0, 40], sizes = [64, 8], strides = [1, 1]} : vector<64x48xf32> to vector<64x8xf32>
    %39 = arith.truncf %38 : vector<64x8xf32> to vector<64x8xbf16>
    "tpu.trace_start"() <{level = 10 : i32, message = "qd,kd->qk"}> : () -> ()
    %cst_14 = arith.constant dense<0.000000e+00> : vector<64x64xf32>
    %40 = tpu.matmul %35, %37, %cst_14 {dimension_numbers = #tpu.dot_dimension_numbers<[1], [1], [0], [0], [0, 0, 1, 0], [], []>} : vector<64x8xbf16>, vector<64x8xbf16>, vector<64x64xf32> -> vector<64x64xf32>
    "tpu.trace_stop"() : () -> ()
    %cst_15 = arith.constant 0.353553385 : f32
    %41 = vector.broadcast %cst_15 : f32 to vector<64x64xf32>
    %42 = arith.mulf %40, %41 : vector<64x64xf32>
    %cst_16 = arith.constant dense<0xFF800000> : vector<64xf32>
    %43 = vector.multi_reduction <maximumf>, %42, %cst_16 [1] : vector<64x64xf32> to vector<64xf32>
    %44 = vector.shape_cast %43 : vector<64xf32> to vector<64x1xf32>
    %45 = vector.broadcast %44 : vector<64x1xf32> to vector<64x64xf32>
    %46 = arith.subf %42, %45 : vector<64x64xf32>
    %47 = math.exp %46 : vector<64x64xf32>
    %cst_17 = arith.constant dense<0.000000e+00> : vector<64xf32>
    %48 = vector.multi_reduction <add>, %47, %cst_17 [1] : vector<64x64xf32> to vector<64xf32>
    %49 = vector.shape_cast %48 : vector<64xf32> to vector<64x1xf32>
    %50 = arith.truncf %47 : vector<64x64xf32> to vector<64x64xbf16>
    %cst_18 = arith.constant dense<0.000000e+00> : vector<64x8xf32>
    %51 = tpu.matmul %50, %39, %cst_18 {dimension_numbers = #tpu.dot_dimension_numbers<[1], [0], [0], [1], [0, 0, 1, 1], [], []>} : vector<64x64xbf16>, vector<64x8xbf16>, vector<64x8xf32> -> vector<64x8xf32>
    %52 = tpu.reciprocal %49 {approx = true} : vector<64x1xf32> -> vector<64x1xf32>
    %53 = vector.broadcast %52 : vector<64x1xf32> to vector<64x8xf32>
    %54 = arith.mulf %51, %53 : vector<64x8xf32>
    %55 = tpu.concatenate %33, %54 in 1 : vector<64x8xf32>, vector<64x8xf32> -> vector<64x16xf32>
    %56 = arith.truncf %55 : vector<64x16xf32> to vector<64x16xbf16>
    %c0_19 = arith.constant 0 : index
    %c0_20 = arith.constant 0 : index
    %57 = vector.load %arg6[%c0_19, %c0_20] : memref<16x16xbf16, #tpu.memory_space<vmem>>, vector<16x16xbf16>
    %cst_21 = arith.constant dense<0.000000e+00> : vector<64x16xf32>
    %58 = tpu.matmul %56, %57, %cst_21 {dimension_numbers = #tpu.dot_dimension_numbers<[1], [0], [0], [1], [0, 0, 1, 1], [], []>} : vector<64x16xbf16>, vector<16x16xbf16>, vector<64x16xf32> -> vector<64x16xf32>
    %c0_22 = arith.constant 0 : index
    %c0_23 = arith.constant 0 : index
    %59 = vector.load %arg7[%c0_22, %c0_23] : memref<1x16xf32, #tpu.memory_space<vmem>>, vector<1x16xf32>
    %60 = vector.broadcast %59 : vector<1x16xf32> to vector<64x16xf32>
    %61 = arith.addf %58, %60 : vector<64x16xf32>
    %c0_24 = arith.constant 0 : index
    %c0_25 = arith.constant 0 : index
    %62 = vector.load %arg8[%c0_24, %c0_25] : memref<1x16xf32, #tpu.memory_space<vmem>>, vector<1x16xf32>
    %63 = vector.broadcast %62 : vector<1x16xf32> to vector<64x16xf32>
    %64 = arith.mulf %63, %61 : vector<64x16xf32>
    %65 = arith.addf %0, %64 : vector<64x16xf32>
    %c0_26 = arith.constant 0 : index
    %c0_27 = arith.constant 0 : index
    %66 = vector.load %arg9[%c0_26, %c0_27] : memref<64x16xf32, #tpu.memory_space<vmem>>, vector<64x16xf32>
    tpu.vector_store %arg9[%c0_26, %c0_27], %65 {strides = array<i32>} : memref<64x16xf32, #tpu.memory_space<vmem>>, vector<64x16xf32>,
    return
  }
  func.func @transform_0(%arg0: i32) -> (i32, i32) {
    %c0_i32 = arith.constant 0 : i32
    %c0_i32_0 = arith.constant 0 : i32
    return %arg0, %c0_i32 : i32, i32
  }
  func.func @transform_1(%arg0: i32) -> (i32, i32) {
    %c0_i32 = arith.constant 0 : i32
    %c0_i32_0 = arith.constant 0 : i32
    %c0_i32_1 = arith.constant 0 : i32
    return %c0_i32, %c0_i32_0 : i32, i32
  }
  func.func @transform_2(%arg0: i32) -> (i32, i32) {
    %c0_i32 = arith.constant 0 : i32
    %c0_i32_0 = arith.constant 0 : i32
    %c0_i32_1 = arith.constant 0 : i32
    return %c0_i32, %c0_i32_0 : i32, i32
  }
  func.func @transform_3(%arg0: i32) -> (i32, i32) {
    %c0_i32 = arith.constant 0 : i32
    %c0_i32_0 = arith.constant 0 : i32
    %c0_i32_1 = arith.constant 0 : i32
    return %c0_i32, %c0_i32_0 : i32, i32
  }
  func.func @transform_4(%arg0: i32) -> (i32, i32) {
    %c0_i32 = arith.constant 0 : i32
    %c0_i32_0 = arith.constant 0 : i32
    %c0_i32_1 = arith.constant 0 : i32
    return %c0_i32, %c0_i32_0 : i32, i32
  }
  func.func @transform_5(%arg0: i32) -> (i32, i32) {
    %c0_i32 = arith.constant 0 : i32
    %c0_i32_0 = arith.constant 0 : i32
    %c0_i32_1 = arith.constant 0 : i32
    return %c0_i32, %c0_i32_0 : i32, i32
  }
  func.func @transform_6(%arg0: i32) -> (i32, i32) {
    %c0_i32 = arith.constant 0 : i32
    %c0_i32_0 = arith.constant 0 : i32
    %c0_i32_1 = arith.constant 0 : i32
    return %c0_i32, %c0_i32_0 : i32, i32
  }
  func.func @transform_7(%arg0: i32) -> (i32, i32) {
    %c0_i32 = arith.constant 0 : i32
    %c0_i32_0 = arith.constant 0 : i32
    %c0_i32_1 = arith.constant 0 : i32
    return %c0_i32, %c0_i32_0 : i32, i32
  }
  func.func @transform_8(%arg0: i32) -> (i32, i32) {
    %c0_i32 = arith.constant 0 : i32
    %c0_i32_0 = arith.constant 0 : i32
    return %arg0, %c0_i32 : i32, i32
  }
}

module attributes {stable_mosaic.version = 11 : i64} {
  func.func @_block2_kernel(%arg0: i32, %arg1: memref<64x16xf32, #tpu.memory_space<vmem>>, %arg2: memref<1x16xf32, #tpu.memory_space<vmem>>, %arg3: memref<1x16xf32, #tpu.memory_space<vmem>>, %arg4: memref<16x32xbf16, #tpu.memory_space<vmem>>, %arg5: memref<1x32xf32, #tpu.memory_space<vmem>>, %arg6: memref<3x3x32xf32, #tpu.memory_space<vmem>>, %arg7: memref<1x1x32xf32, #tpu.memory_space<vmem>>, %arg8: memref<32x16xbf16, #tpu.memory_space<vmem>>, %arg9: memref<1x16xf32, #tpu.memory_space<vmem>>, %arg10: memref<1x16xf32, #tpu.memory_space<vmem>>, %arg11: memref<64x16xf32, #tpu.memory_space<vmem>>, %arg12: memref<10x10x32xf32, #tpu.memory_space<vmem>>) attributes {dimension_semantics = [#tpu.dimension_semantics<parallel>], iteration_bounds = array<i64: 2>, scalar_prefetch = 0 : i64, scratch_operands = 1 : i64, tpu.core_type = #tpu.core_type<tc>, window_params = [{transform_indices = @transform_0, window_bounds = array<i64: 64, 16>}, {pipeline_mode = #tpu.pipeline_mode<synchronous>, transform_indices = @transform_1, window_bounds = array<i64: 1, 16>}, {pipeline_mode = #tpu.pipeline_mode<synchronous>, transform_indices = @transform_2, window_bounds = array<i64: 1, 16>}, {pipeline_mode = #tpu.pipeline_mode<synchronous>, transform_indices = @transform_3, window_bounds = array<i64: 16, 32>}, {pipeline_mode = #tpu.pipeline_mode<synchronous>, transform_indices = @transform_4, window_bounds = array<i64: 1, 32>}, {pipeline_mode = #tpu.pipeline_mode<synchronous>, transform_indices = @transform_5, window_bounds = array<i64: 3, 3, 32>}, {pipeline_mode = #tpu.pipeline_mode<synchronous>, transform_indices = @transform_6, window_bounds = array<i64: 1, 1, 32>}, {pipeline_mode = #tpu.pipeline_mode<synchronous>, transform_indices = @transform_7, window_bounds = array<i64: 32, 16>}, {pipeline_mode = #tpu.pipeline_mode<synchronous>, transform_indices = @transform_8, window_bounds = array<i64: 1, 16>}, {pipeline_mode = #tpu.pipeline_mode<synchronous>, transform_indices = @transform_9, window_bounds = array<i64: 1, 16>}, {transform_indices = @transform_10, window_bounds = array<i64: 64, 16>}]} {
    %c0 = arith.constant 0 : index
    %c0_0 = arith.constant 0 : index
    %0 = vector.load %arg1[%c0, %c0_0] : memref<64x16xf32, #tpu.memory_space<vmem>>, vector<64x16xf32>
    %c0_1 = arith.constant 0 : index
    %c0_2 = arith.constant 0 : index
    %1 = vector.load %arg2[%c0_1, %c0_2] : memref<1x16xf32, #tpu.memory_space<vmem>>, vector<1x16xf32>
    %2 = vector.broadcast %1 : vector<1x16xf32> to vector<64x16xf32>
    %3 = arith.mulf %0, %2 : vector<64x16xf32>
    %c0_3 = arith.constant 0 : index
    %c0_4 = arith.constant 0 : index
    %4 = vector.load %arg3[%c0_3, %c0_4] : memref<1x16xf32, #tpu.memory_space<vmem>>, vector<1x16xf32>
    %5 = vector.broadcast %4 : vector<1x16xf32> to vector<64x16xf32>
    %6 = arith.addf %3, %5 : vector<64x16xf32>
    %7 = arith.truncf %6 : vector<64x16xf32> to vector<64x16xbf16>
    %c0_5 = arith.constant 0 : index
    %c0_6 = arith.constant 0 : index
    %8 = vector.load %arg4[%c0_5, %c0_6] : memref<16x32xbf16, #tpu.memory_space<vmem>>, vector<16x32xbf16>
    %cst = arith.constant dense<0.000000e+00> : vector<64x32xf32>
    %9 = tpu.matmul %7, %8, %cst {dimension_numbers = #tpu.dot_dimension_numbers<[1], [0], [0], [1], [0, 0, 1, 1], [], []>} : vector<64x16xbf16>, vector<16x32xbf16>, vector<64x32xf32> -> vector<64x32xf32>
    %c0_7 = arith.constant 0 : index
    %c0_8 = arith.constant 0 : index
    %10 = vector.load %arg5[%c0_7, %c0_8] : memref<1x32xf32, #tpu.memory_space<vmem>>, vector<1x32xf32>
    %11 = vector.broadcast %10 : vector<1x32xf32> to vector<64x32xf32>
    %12 = arith.addf %9, %11 : vector<64x32xf32>
    %13 = arith.mulf %12, %12 : vector<64x32xf32>
    %14 = arith.mulf %12, %13 : vector<64x32xf32>
    %cst_9 = arith.constant 4.471500e-02 : f32
    %15 = vector.broadcast %cst_9 : f32 to vector<64x32xf32>
    %16 = arith.mulf %15, %14 : vector<64x32xf32>
    %17 = arith.addf %12, %16 : vector<64x32xf32>
    %cst_10 = arith.constant 0.797884583 : f32
    %18 = vector.broadcast %cst_10 : f32 to vector<64x32xf32>
    %19 = arith.mulf %18, %17 : vector<64x32xf32>
    %20 = math.tanh %19 : vector<64x32xf32>
    %cst_11 = arith.constant 1.000000e+00 : f32
    %21 = vector.broadcast %cst_11 : f32 to vector<64x32xf32>
    %22 = arith.addf %21, %20 : vector<64x32xf32>
    %cst_12 = arith.constant 5.000000e-01 : f32
    %23 = vector.broadcast %cst_12 : f32 to vector<64x32xf32>
    %24 = arith.mulf %23, %22 : vector<64x32xf32>
    %25 = arith.mulf %12, %24 : vector<64x32xf32>
    %cst_13 = arith.constant 0.000000e+00 : f32
    %26 = vector.broadcast %cst_13 : f32 to vector<10x10x32xf32>
    %c0_14 = arith.constant 0 : index
    %c0_15 = arith.constant 0 : index
    %c0_16 = arith.constant 0 : index
    %27 = vector.load %arg12[%c0_14, %c0_15, %c0_16] : memref<10x10x32xf32, #tpu.memory_space<vmem>>, vector<10x10x32xf32>
    tpu.vector_store %arg12[%c0_14, %c0_15, %c0_16], %26 {strides = array<i32>} : memref<10x10x32xf32, #tpu.memory_space<vmem>>, vector<10x10x32xf32>,
    %28 = vector.shape_cast %25 : vector<64x32xf32> to vector<8x8x32xf32>
    %c1 = arith.constant 1 : index
    %c1_17 = arith.constant 1 : index
    %c0_18 = arith.constant 0 : index
    %29 = vector.load %arg12[%c1, %c1_17, %c0_18] : memref<10x10x32xf32, #tpu.memory_space<vmem>>, vector<8x8x32xf32>
    tpu.vector_store %arg12[%c1, %c1_17, %c0_18], %28 {strides = array<i32>} : memref<10x10x32xf32, #tpu.memory_space<vmem>>, vector<8x8x32xf32>,
    %c0_19 = arith.constant 0 : index
    %c0_20 = arith.constant 0 : index
    %c0_21 = arith.constant 0 : index
    %30 = vector.load %arg6[%c0_19, %c0_20, %c0_21] : memref<3x3x32xf32, #tpu.memory_space<vmem>>, vector<3x3x32xf32>
    %cst_22 = arith.constant 0.000000e+00 : f32
    %31 = vector.broadcast %cst_22 : f32 to vector<8x8x32xf32>
    %c0_23 = arith.constant 0 : index
    %c0_24 = arith.constant 0 : index
    %c0_25 = arith.constant 0 : index
    %32 = vector.load %arg12[%c0_23, %c0_24, %c0_25] : memref<10x10x32xf32, #tpu.memory_space<vmem>>, vector<8x8x32xf32>
    %33 = vector.extract_strided_slice %30 {offsets = [0, 0, 0], sizes = [1, 1, 32], strides = [1, 1, 1]} : vector<3x3x32xf32> to vector<1x1x32xf32>
    %34 = vector.broadcast %33 : vector<1x1x32xf32> to vector<8x8x32xf32>
    %35 = arith.mulf %32, %34 : vector<8x8x32xf32>
    %36 = arith.addf %31, %35 : vector<8x8x32xf32>
    %c0_26 = arith.constant 0 : index
    %c1_27 = arith.constant 1 : index
    %c0_28 = arith.constant 0 : index
    %37 = vector.load %arg12[%c0_26, %c1_27, %c0_28] : memref<10x10x32xf32, #tpu.memory_space<vmem>>, vector<8x8x32xf32>
    %38 = vector.extract_strided_slice %30 {offsets = [0, 1, 0], sizes = [1, 1, 32], strides = [1, 1, 1]} : vector<3x3x32xf32> to vector<1x1x32xf32>
    %39 = vector.broadcast %38 : vector<1x1x32xf32> to vector<8x8x32xf32>
    %40 = arith.mulf %37, %39 : vector<8x8x32xf32>
    %41 = arith.addf %36, %40 : vector<8x8x32xf32>
    %c0_29 = arith.constant 0 : index
    %c2 = arith.constant 2 : index
    %c0_30 = arith.constant 0 : index
    %42 = vector.load %arg12[%c0_29, %c2, %c0_30] : memref<10x10x32xf32, #tpu.memory_space<vmem>>, vector<8x8x32xf32>
    %43 = vector.extract_strided_slice %30 {offsets = [0, 2, 0], sizes = [1, 1, 32], strides = [1, 1, 1]} : vector<3x3x32xf32> to vector<1x1x32xf32>
    %44 = vector.broadcast %43 : vector<1x1x32xf32> to vector<8x8x32xf32>
    %45 = arith.mulf %42, %44 : vector<8x8x32xf32>
    %46 = arith.addf %41, %45 : vector<8x8x32xf32>
    %c1_31 = arith.constant 1 : index
    %c0_32 = arith.constant 0 : index
    %c0_33 = arith.constant 0 : index
    %47 = vector.load %arg12[%c1_31, %c0_32, %c0_33] : memref<10x10x32xf32, #tpu.memory_space<vmem>>, vector<8x8x32xf32>
    %48 = vector.extract_strided_slice %30 {offsets = [1, 0, 0], sizes = [1, 1, 32], strides = [1, 1, 1]} : vector<3x3x32xf32> to vector<1x1x32xf32>
    %49 = vector.broadcast %48 : vector<1x1x32xf32> to vector<8x8x32xf32>
    %50 = arith.mulf %47, %49 : vector<8x8x32xf32>
    %51 = arith.addf %46, %50 : vector<8x8x32xf32>
    %c1_34 = arith.constant 1 : index
    %c1_35 = arith.constant 1 : index
    %c0_36 = arith.constant 0 : index
    %52 = vector.load %arg12[%c1_34, %c1_35, %c0_36] : memref<10x10x32xf32, #tpu.memory_space<vmem>>, vector<8x8x32xf32>
    %53 = vector.extract_strided_slice %30 {offsets = [1, 1, 0], sizes = [1, 1, 32], strides = [1, 1, 1]} : vector<3x3x32xf32> to vector<1x1x32xf32>
    %54 = vector.broadcast %53 : vector<1x1x32xf32> to vector<8x8x32xf32>
    %55 = arith.mulf %52, %54 : vector<8x8x32xf32>
    %56 = arith.addf %51, %55 : vector<8x8x32xf32>
    %c1_37 = arith.constant 1 : index
    %c2_38 = arith.constant 2 : index
    %c0_39 = arith.constant 0 : index
    %57 = vector.load %arg12[%c1_37, %c2_38, %c0_39] : memref<10x10x32xf32, #tpu.memory_space<vmem>>, vector<8x8x32xf32>
    %58 = vector.extract_strided_slice %30 {offsets = [1, 2, 0], sizes = [1, 1, 32], strides = [1, 1, 1]} : vector<3x3x32xf32> to vector<1x1x32xf32>
    %59 = vector.broadcast %58 : vector<1x1x32xf32> to vector<8x8x32xf32>
    %60 = arith.mulf %57, %59 : vector<8x8x32xf32>
    %61 = arith.addf %56, %60 : vector<8x8x32xf32>
    %c2_40 = arith.constant 2 : index
    %c0_41 = arith.constant 0 : index
    %c0_42 = arith.constant 0 : index
    %62 = vector.load %arg12[%c2_40, %c0_41, %c0_42] : memref<10x10x32xf32, #tpu.memory_space<vmem>>, vector<8x8x32xf32>
    %63 = vector.extract_strided_slice %30 {offsets = [2, 0, 0], sizes = [1, 1, 32], strides = [1, 1, 1]} : vector<3x3x32xf32> to vector<1x1x32xf32>
    %64 = vector.broadcast %63 : vector<1x1x32xf32> to vector<8x8x32xf32>
    %65 = arith.mulf %62, %64 : vector<8x8x32xf32>
    %66 = arith.addf %61, %65 : vector<8x8x32xf32>
    %c2_43 = arith.constant 2 : index
    %c1_44 = arith.constant 1 : index
    %c0_45 = arith.constant 0 : index
    %67 = vector.load %arg12[%c2_43, %c1_44, %c0_45] : memref<10x10x32xf32, #tpu.memory_space<vmem>>, vector<8x8x32xf32>
    %68 = vector.extract_strided_slice %30 {offsets = [2, 1, 0], sizes = [1, 1, 32], strides = [1, 1, 1]} : vector<3x3x32xf32> to vector<1x1x32xf32>
    %69 = vector.broadcast %68 : vector<1x1x32xf32> to vector<8x8x32xf32>
    %70 = arith.mulf %67, %69 : vector<8x8x32xf32>
    %71 = arith.addf %66, %70 : vector<8x8x32xf32>
    %c2_46 = arith.constant 2 : index
    %c2_47 = arith.constant 2 : index
    %c0_48 = arith.constant 0 : index
    %72 = vector.load %arg12[%c2_46, %c2_47, %c0_48] : memref<10x10x32xf32, #tpu.memory_space<vmem>>, vector<8x8x32xf32>
    %73 = vector.extract_strided_slice %30 {offsets = [2, 2, 0], sizes = [1, 1, 32], strides = [1, 1, 1]} : vector<3x3x32xf32> to vector<1x1x32xf32>
    %74 = vector.broadcast %73 : vector<1x1x32xf32> to vector<8x8x32xf32>
    %75 = arith.mulf %72, %74 : vector<8x8x32xf32>
    %76 = arith.addf %71, %75 : vector<8x8x32xf32>
    %c0_49 = arith.constant 0 : index
    %c0_50 = arith.constant 0 : index
    %c0_51 = arith.constant 0 : index
    %77 = vector.load %arg7[%c0_49, %c0_50, %c0_51] : memref<1x1x32xf32, #tpu.memory_space<vmem>>, vector<1x1x32xf32>
    %78 = vector.broadcast %77 : vector<1x1x32xf32> to vector<8x8x32xf32>
    %79 = arith.addf %76, %78 : vector<8x8x32xf32>
    %80 = arith.mulf %79, %79 : vector<8x8x32xf32>
    %81 = arith.mulf %79, %80 : vector<8x8x32xf32>
    %cst_52 = arith.constant 4.471500e-02 : f32
    %82 = vector.broadcast %cst_52 : f32 to vector<8x8x32xf32>
    %83 = arith.mulf %82, %81 : vector<8x8x32xf32>
    %84 = arith.addf %79, %83 : vector<8x8x32xf32>
    %cst_53 = arith.constant 0.797884583 : f32
    %85 = vector.broadcast %cst_53 : f32 to vector<8x8x32xf32>
    %86 = arith.mulf %85, %84 : vector<8x8x32xf32>
    %87 = math.tanh %86 : vector<8x8x32xf32>
    %cst_54 = arith.constant 1.000000e+00 : f32
    %88 = vector.broadcast %cst_54 : f32 to vector<8x8x32xf32>
    %89 = arith.addf %88, %87 : vector<8x8x32xf32>
    %cst_55 = arith.constant 5.000000e-01 : f32
    %90 = vector.broadcast %cst_55 : f32 to vector<8x8x32xf32>
    %91 = arith.mulf %90, %89 : vector<8x8x32xf32>
    %92 = arith.mulf %79, %91 : vector<8x8x32xf32>
    %93 = vector.shape_cast %92 : vector<8x8x32xf32> to vector<64x32xf32>
    %94 = arith.truncf %93 : vector<64x32xf32> to vector<64x32xbf16>
    %c0_56 = arith.constant 0 : index
    %c0_57 = arith.constant 0 : index
    %95 = vector.load %arg8[%c0_56, %c0_57] : memref<32x16xbf16, #tpu.memory_space<vmem>>, vector<32x16xbf16>
    %cst_58 = arith.constant dense<0.000000e+00> : vector<64x16xf32>
    %96 = tpu.matmul %94, %95, %cst_58 {dimension_numbers = #tpu.dot_dimension_numbers<[1], [0], [0], [1], [0, 0, 1, 1], [], []>} : vector<64x32xbf16>, vector<32x16xbf16>, vector<64x16xf32> -> vector<64x16xf32>
    %c0_59 = arith.constant 0 : index
    %c0_60 = arith.constant 0 : index
    %97 = vector.load %arg9[%c0_59, %c0_60] : memref<1x16xf32, #tpu.memory_space<vmem>>, vector<1x16xf32>
    %98 = vector.broadcast %97 : vector<1x16xf32> to vector<64x16xf32>
    %99 = arith.addf %96, %98 : vector<64x16xf32>
    %c0_61 = arith.constant 0 : index
    %c0_62 = arith.constant 0 : index
    %100 = vector.load %arg10[%c0_61, %c0_62] : memref<1x16xf32, #tpu.memory_space<vmem>>, vector<1x16xf32>
    %101 = vector.broadcast %100 : vector<1x16xf32> to vector<64x16xf32>
    %102 = arith.mulf %101, %99 : vector<64x16xf32>
    %103 = arith.addf %0, %102 : vector<64x16xf32>
    %c0_63 = arith.constant 0 : index
    %c0_64 = arith.constant 0 : index
    %104 = vector.load %arg11[%c0_63, %c0_64] : memref<64x16xf32, #tpu.memory_space<vmem>>, vector<64x16xf32>
    tpu.vector_store %arg11[%c0_63, %c0_64], %103 {strides = array<i32>} : memref<64x16xf32, #tpu.memory_space<vmem>>, vector<64x16xf32>,
    return
  }
  func.func @transform_0(%arg0: i32) -> (i32, i32) {
    %c0_i32 = arith.constant 0 : i32
    %c0_i32_0 = arith.constant 0 : i32
    return %arg0, %c0_i32 : i32, i32
  }
  func.func @transform_1(%arg0: i32) -> (i32, i32) {
    %c0_i32 = arith.constant 0 : i32
    %c0_i32_0 = arith.constant 0 : i32
    %c0_i32_1 = arith.constant 0 : i32
    return %c0_i32, %c0_i32_0 : i32, i32
  }
  func.func @transform_2(%arg0: i32) -> (i32, i32) {
    %c0_i32 = arith.constant 0 : i32
    %c0_i32_0 = arith.constant 0 : i32
    %c0_i32_1 = arith.constant 0 : i32
    return %c0_i32, %c0_i32_0 : i32, i32
  }
  func.func @transform_3(%arg0: i32) -> (i32, i32) {
    %c0_i32 = arith.constant 0 : i32
    %c0_i32_0 = arith.constant 0 : i32
    %c0_i32_1 = arith.constant 0 : i32
    return %c0_i32, %c0_i32_0 : i32, i32
  }
  func.func @transform_4(%arg0: i32) -> (i32, i32) {
    %c0_i32 = arith.constant 0 : i32
    %c0_i32_0 = arith.constant 0 : i32
    %c0_i32_1 = arith.constant 0 : i32
    return %c0_i32, %c0_i32_0 : i32, i32
  }
  func.func @transform_5(%arg0: i32) -> (i32, i32, i32) {
    %c0_i32 = arith.constant 0 : i32
    %c0_i32_0 = arith.constant 0 : i32
    %c0_i32_1 = arith.constant 0 : i32
    %c0_i32_2 = arith.constant 0 : i32
    return %c0_i32, %c0_i32_0, %c0_i32_1 : i32, i32, i32
  }
  func.func @transform_6(%arg0: i32) -> (i32, i32, i32) {
    %c0_i32 = arith.constant 0 : i32
    %c0_i32_0 = arith.constant 0 : i32
    %c0_i32_1 = arith.constant 0 : i32
    %c0_i32_2 = arith.constant 0 : i32
    return %c0_i32, %c0_i32_0, %c0_i32_1 : i32, i32, i32
  }
  func.func @transform_7(%arg0: i32) -> (i32, i32) {
    %c0_i32 = arith.constant 0 : i32
    %c0_i32_0 = arith.constant 0 : i32
    %c0_i32_1 = arith.constant 0 : i32
    return %c0_i32, %c0_i32_0 : i32, i32
  }
  func.func @transform_8(%arg0: i32) -> (i32, i32) {
    %c0_i32 = arith.constant 0 : i32
    %c0_i32_0 = arith.constant 0 : i32
    %c0_i32_1 = arith.constant 0 : i32
    return %c0_i32, %c0_i32_0 : i32, i32
  }
  func.func @transform_9(%arg0: i32) -> (i32, i32) {
    %c0_i32 = arith.constant 0 : i32
    %c0_i32_0 = arith.constant 0 : i32
    %c0_i32_1 = arith.constant 0 : i32
    return %c0_i32, %c0_i32_0 : i32, i32
  }
  func.func @transform_10(%arg0: i32) -> (i32, i32) {
    %c0_i32 = arith.constant 0 : i32
    %c0_i32_0 = arith.constant 0 : i32
    return %arg0, %c0_i32 : i32, i32
  }
}

</mosaic_0001>

<llo_original>
// kernel: transformer_encoder_convlike.3
$region0: #{transformer_encoder_convlike.3}
  #allocation0 [shape = 'u32[]', space=smem, size = 0x4, offset = 0x4, fixed_abs, tag = 'smem constant byte address 0x4 - core index']
  #allocation1 [shape = 'u32[144,128]{1,0:T(1,128)}', space=vmem, size = 0x12000, scoped, tag = 'internal scratch']
  #allocation2 [shape = 'f32[10,10,32]{2,1,0:T(8,128)}', space=vmem, size = 0x14000, scoped, tag = 'scratch operand']
  %s0 = inlined_call_operand.vmem [shape: f32[128,16], index: 0, kind: input, shape index: {}]
  %s1 = inlined_call_operand.vmem [shape: f32[1,16], index: 1, kind: input, shape index: {}]
  %s2 = inlined_call_operand.vmem [shape: f32[1,16], index: 2, kind: input, shape index: {}]
  %s3 = inlined_call_operand.vmem [shape: bf16[16,32], index: 3, kind: input, shape index: {}]
  %s4 = inlined_call_operand.vmem [shape: f32[1,32], index: 4, kind: input, shape index: {}]
  %s5 = inlined_call_operand.vmem [shape: f32[3,3,32], index: 5, kind: input, shape index: {}]
  %s6 = inlined_call_operand.vmem [shape: f32[1,1,32], index: 6, kind: input, shape index: {}]
  %s7 = inlined_call_operand.vmem [shape: bf16[32,16], index: 7, kind: input, shape index: {}]
  %s8 = inlined_call_operand.vmem [shape: f32[1,16], index: 8, kind: input, shape index: {}]
  %s9 = inlined_call_operand.vmem [shape: f32[1,16], index: 9, kind: input, shape index: {}]
  %s10 = inlined_call_operand.hbm [shape: f32[128,16], index: 10, kind: output, shape index: {}]
  %s11 = sld [smem:[#allocation0]]
  $region73: #{transformer_encoder_convlike.3} parent=0
    _
  %s13 = ssub.s32 1, %s11
  %s14 = scalar_select 0, %s13, %s11
  $region1: #{transformer_encoder_convlike.3} parent=0
    #allocation3 [shape = 'u8[65536]{0}', space=vmem, size = 0x10000, scoped, tag = 'output window, operand 0']
    #allocation4 [shape = 's32[2]{0}', space=sflag, size = 0x8, scoped, tag = 'scoped memory for transformer_encoder_convlike.3']
    %15 = vsyncpa [#allocation4], 0
    %s16 = scalar_lea.sflag [#allocation4], 1
    %17 = vsyncpa %s16, 0
    loop: start=0, step=1, limit=4
    $region2: #{transformer_encoder_convlike.3} parent=1 // loop_pre_header
      _
    $region3: #{transformer_encoder_convlike.3} parent=1 // loop_header
      %s19 = sphi 0, %s23
      %p20 = scmp.ge.s32.totalorder %s19, 4
      %s29 = sphi 0, %s31
      %s32 = sphi 0, %s29
      %s33 = sphi 0, %s32
      %s49 = sphi 0, %s33
      %s53 = sphi 0, %s53
      %s55 = sphi 0, %s53
      %s56 = sphi 0, %s55
      %s70 = sphi 0, %s56
      %s74 = sphi 0, %s74
      %s76 = sphi 0, %s74
      %s77 = sphi 0, %s76
      %s91 = sphi 0, %s77
      %s95 = sphi 0, %s95
      %s97 = sphi 0, %s95
      %s98 = sphi 0, %s97
      %s112 = sphi 0, %s98
      %s116 = sphi 0, %s116
      %s118 = sphi 0, %s116
      %s119 = sphi 0, %s118
      %s133 = sphi 0, %s119
      %s137 = sphi 0, %s137
      %s139 = sphi 0, %s137
      %s140 = sphi 0, %s139
      %s154 = sphi 0, %s140
      %s158 = sphi 0, %s158
      %s160 = sphi 0, %s158
      %s161 = sphi 0, %s160
      %s175 = sphi 0, %s161
      %s179 = sphi 0, %s179
      %s181 = sphi 0, %s179
      %s182 = sphi 0, %s181
      %s196 = sphi 0, %s182
      %s200 = sphi 0, %s200
      %s202 = sphi 0, %s200
      %s203 = sphi 0, %s202
      %s217 = sphi 0, %s203
      %s221 = sphi 0, %s221
      %s223 = sphi 0, %s221
      %s224 = sphi 0, %s223
      %s238 = sphi 0, %s224
      %s244 = sphi 0, %s246
      %s247 = sphi 0, %s244
      %s248 = sphi 0, %s247
      %s264 = sphi 0, %s248
    $region4: #{transformer_encoder_convlike.3} parent=1 // loop_header_branch
      %22 = sbr.rel (%p20) target = $region8
    $region5: #{transformer_encoder_convlike.3} parent=1 // loop_body
      %s24 = ssub.s32 %s19, 1
      %s25 = ssub.s32 %s19, 2
      %s26 = sadd.s32 %s19, 1
      %s27 = ssub.s32 %s19, %s26
      %p28 = scmp.eq.s32.totalorder %s27, 0
      %s30 = sadd.s32 %s29, 1
      %s31 = scalar_select %p28, %s29, %s30
      %p34 = pneg %p28
      %p35 = scmp.eq.s32.totalorder %s19, 1
      %p36 = por %p34, %p35
      %p37 = scmp.ne.s32.totalorder %s29, %s32
      %p38 = scmp.eq.s32.totalorder %s19, 0
      %p39 = por %p37, %p38
      %p40 = scmp.ne.s32.totalorder %s29, %s32
      %p41 = scmp.eq.s32.totalorder %s24, 1
      %p42 = por %p40, %p41
      %p43 = scmp.ne.s32.totalorder %s32, %s33
      %p44 = scmp.eq.s32.totalorder %s24, 0
      %p45 = por %p43, %p44
      %p46 = scmp.ne.s32.totalorder %s32, %s33
      %p47 = scmp.eq.s32.totalorder %s25, 1
      %p48 = por %p46, %p47
      %p50 = scmp.ne.s32.totalorder %s33, %s49
      %p51 = scmp.eq.s32.totalorder %s25, 0
      %p52 = por %p50, %p51
      %s54 = sadd.s32 %s53, 1
      %p57 = scmp.eq.s32.totalorder %s19, 1
      %p58 = scmp.ne.s32.totalorder %s53, %s55
      %p59 = scmp.eq.s32.totalorder %s19, 0
      %p60 = por %p58, %p59
      %p61 = scmp.ne.s32.totalorder %s53, %s55
      %p62 = scmp.eq.s32.totalorder %s24, 1
      %p63 = por %p61, %p62
      %p64 = scmp.ne.s32.totalorder %s55, %s56
      %p65 = scmp.eq.s32.totalorder %s24, 0
      %p66 = por %p64, %p65
      %p67 = scmp.ne.s32.totalorder %s55, %s56
      %p68 = scmp.eq.s32.totalorder %s25, 1
      %p69 = por %p67, %p68
      %p71 = scmp.ne.s32.totalorder %s56, %s70
      %p72 = scmp.eq.s32.totalorder %s25, 0
      %p73 = por %p71, %p72
      %s75 = sadd.s32 %s74, 1
      %p78 = scmp.eq.s32.totalorder %s19, 1
      %p79 = scmp.ne.s32.totalorder %s74, %s76
      %p80 = scmp.eq.s32.totalorder %s19, 0
      %p81 = por %p79, %p80
      %p82 = scmp.ne.s32.totalorder %s74, %s76
      %p83 = scmp.eq.s32.totalorder %s24, 1
      %p84 = por %p82, %p83
      %p85 = scmp.ne.s32.totalorder %s76, %s77
      %p86 = scmp.eq.s32.totalorder %s24, 0
      %p87 = por %p85, %p86
      %p88 = scmp.ne.s32.totalorder %s76, %s77
      %p89 = scmp.eq.s32.totalorder %s25, 1
      %p90 = por %p88, %p89
      %p92 = scmp.ne.s32.totalorder %s77, %s91
      %p93 = scmp.eq.s32.totalorder %s25, 0
      %p94 = por %p92, %p93
      %s96 = sadd.s32 %s95, 1
      %p99 = scmp.eq.s32.totalorder %s19, 1
      %p100 = scmp.ne.s32.totalorder %s95, %s97
      %p101 = scmp.eq.s32.totalorder %s19, 0
      %p102 = por %p100, %p101
      %p103 = scmp.ne.s32.totalorder %s95, %s97
      %p104 = scmp.eq.s32.totalorder %s24, 1
      %p105 = por %p103, %p104
      %p106 = scmp.ne.s32.totalorder %s97, %s98
      %p107 = scmp.eq.s32.totalorder %s24, 0
      %p108 = por %p106, %p107
      %p109 = scmp.ne.s32.totalorder %s97, %s98
      %p110 = scmp.eq.s32.totalorder %s25, 1
      %p111 = por %p109, %p110
      %p113 = scmp.ne.s32.totalorder %s98, %s112
      %p114 = scmp.eq.s32.totalorder %s25, 0
      %p115 = por %p113, %p114
      %s117 = sadd.s32 %s116, 1
      %p120 = scmp.eq.s32.totalorder %s19, 1
      %p121 = scmp.ne.s32.totalorder %s116, %s118
      %p122 = scmp.eq.s32.totalorder %s19, 0
      %p123 = por %p121, %p122
      %p124 = scmp.ne.s32.totalorder %s116, %s118
      %p125 = scmp.eq.s32.totalorder %s24, 1
      %p126 = por %p124, %p125
      %p127 = scmp.ne.s32.totalorder %s118, %s119
      %p128 = scmp.eq.s32.totalorder %s24, 0
      %p129 = por %p127, %p128
      %p130 = scmp.ne.s32.totalorder %s118, %s119
      %p131 = scmp.eq.s32.totalorder %s25, 1
      %p132 = por %p130, %p131
      %p134 = scmp.ne.s32.totalorder %s119, %s133
      %p135 = scmp.eq.s32.totalorder %s25, 0
      %p136 = por %p134, %p135
      %s138 = sadd.s32 %s137, 1
      %p141 = scmp.eq.s32.totalorder %s19, 1
      %p142 = scmp.ne.s32.totalorder %s137, %s139
      %p143 = scmp.eq.s32.totalorder %s19, 0
      %p144 = por %p142, %p143
      %p145 = scmp.ne.s32.totalorder %s137, %s139
      %p146 = scmp.eq.s32.totalorder %s24, 1
      %p147 = por %p145, %p146
      %p148 = scmp.ne.s32.totalorder %s139, %s140
      %p149 = scmp.eq.s32.totalorder %s24, 0
      %p150 = por %p148, %p149
      %p151 = scmp.ne.s32.totalorder %s139, %s140
      %p152 = scmp.eq.s32.totalorder %s25, 1
      %p153 = por %p151, %p152
      %p155 = scmp.ne.s32.totalorder %s140, %s154
      %p156 = scmp.eq.s32.totalorder %s25, 0
      %p157 = por %p155, %p156
      %s159 = sadd.s32 %s158, 1
      %p162 = scmp.eq.s32.totalorder %s19, 1
      %p163 = scmp.ne.s32.totalorder %s158, %s160
      %p164 = scmp.eq.s32.totalorder %s19, 0
      %p165 = por %p163, %p164
      %p166 = scmp.ne.s32.totalorder %s158, %s160
      %p167 = scmp.eq.s32.totalorder %s24, 1
      %p168 = por %p166, %p167
      %p169 = scmp.ne.s32.totalorder %s160, %s161
      %p170 = scmp.eq.s32.totalorder %s24, 0
      %p171 = por %p169, %p170
      %p172 = scmp.ne.s32.totalorder %s160, %s161
      %p173 = scmp.eq.s32.totalorder %s25, 1
      %p174 = por %p172, %p173
      %p176 = scmp.ne.s32.totalorder %s161, %s175
      %p177 = scmp.eq.s32.totalorder %s25, 0
      %p178 = por %p176, %p177
      %s180 = sadd.s32 %s179, 1
      %p183 = scmp.eq.s32.totalorder %s19, 1
      %p184 = scmp.ne.s32.totalorder %s179, %s181
      %p185 = scmp.eq.s32.totalorder %s19, 0
      %p186 = por %p184, %p185
      %p187 = scmp.ne.s32.totalorder %s179, %s181
      %p188 = scmp.eq.s32.totalorder %s24, 1
      %p189 = por %p187, %p188
      %p190 = scmp.ne.s32.totalorder %s181, %s182
      %p191 = scmp.eq.s32.totalorder %s24, 0
      %p192 = por %p190, %p191
      %p193 = scmp.ne.s32.totalorder %s181, %s182
      %p194 = scmp.eq.s32.totalorder %s25, 1
      %p195 = por %p193, %p194
      %p197 = scmp.ne.s32.totalorder %s182, %s196
      %p198 = scmp.eq.s32.totalorder %s25, 0
      %p199 = por %p197, %p198
      %s201 = sadd.s32 %s200, 1
      %p204 = scmp.eq.s32.totalorder %s19, 1
      %p205 = scmp.ne.s32.totalorder %s200, %s202
      %p206 = scmp.eq.s32.totalorder %s19, 0
      %p207 = por %p205, %p206
      %p208 = scmp.ne.s32.totalorder %s200, %s202
      %p209 = scmp.eq.s32.totalorder %s24, 1
      %p210 = por %p208, %p209
      %p211 = scmp.ne.s32.totalorder %s202, %s203
      %p212 = scmp.eq.s32.totalorder %s24, 0
      %p213 = por %p211, %p212
      %p214 = scmp.ne.s32.totalorder %s202, %s203
      %p215 = scmp.eq.s32.totalorder %s25, 1
      %p216 = por %p214, %p215
      %p218 = scmp.ne.s32.totalorder %s203, %s217
      %p219 = scmp.eq.s32.totalorder %s25, 0
      %p220 = por %p218, %p219
      %s222 = sadd.s32 %s221, 1
      %p225 = scmp.eq.s32.totalorder %s19, 1
      %p226 = scmp.ne.s32.totalorder %s221, %s223
      %p227 = scmp.eq.s32.totalorder %s19, 0
      %p228 = por %p226, %p227
      %p229 = scmp.ne.s32.totalorder %s221, %s223
      %p230 = scmp.eq.s32.totalorder %s24, 1
      %p231 = por %p229, %p230
      %p232 = scmp.ne.s32.totalorder %s223, %s224
      %p233 = scmp.eq.s32.totalorder %s24, 0
      %p234 = por %p232, %p233
      %p235 = scmp.ne.s32.totalorder %s223, %s224
      %p236 = scmp.eq.s32.totalorder %s25, 1
      %p237 = por %p235, %p236
      %p239 = scmp.ne.s32.totalorder %s224, %s238
      %p240 = scmp.eq.s32.totalorder %s25, 0
      %p241 = por %p239, %p240
      %s242 = ssub.s32 %s19, %s26
      %p243 = scmp.eq.s32.totalorder %s242, 0
      %s245 = sadd.s32 %s244, 1
      %s246 = scalar_select %p243, %s244, %s245
      %p249 = pneg %p243
      %p250 = scmp.eq.s32.totalorder %s19, 1
      %p251 = por %p249, %p250
      %p252 = scmp.ne.s32.totalorder %s244, %s247
      %p253 = scmp.eq.s32.totalorder %s19, 0
      %p254 = por %p252, %p253
      %p255 = scmp.ne.s32.totalorder %s244, %s247
      %p256 = scmp.eq.s32.totalorder %s24, 1
      %p257 = por %p255, %p256
      %p258 = scmp.ne.s32.totalorder %s247, %s248
      %p259 = scmp.eq.s32.totalorder %s24, 0
      %p260 = por %p258, %p259
      %p261 = scmp.ne.s32.totalorder %s247, %s248
      %p262 = scmp.eq.s32.totalorder %s25, 1
      %p263 = por %p261, %p262
      %p265 = scmp.ne.s32.totalorder %s248, %s264
      %p266 = scmp.eq.s32.totalorder %s25, 0
      %p267 = por %p265, %p266
      %p268 = scmp.le.s32.totalorder 1, %s19
      %p269 = scmp.lt.s32.totalorder %s19, 3
      %p270 = pnand %p268, %p269
      %p271 = pneg %p270
      // Predicated region
      $region9: #{transformer_encoder_convlike.3} parent=5 // pred_check
        _
      $region10: #{transformer_encoder_convlike.3} parent=5 // pred_check_branch
        %273 = sbr.rel (%p270) target = $region12
      $region11: #{transformer_encoder_convlike.3} parent=5 // pred_region
        %s274 = ssub.s32 %s19, 1
        // Predicated region
        $region13: #{transformer_encoder_convlike.3} parent=11 // pred_check
          %p275 = pneg %p66
        $region14: #{transformer_encoder_convlike.3} parent=11 // pred_check_branch
          %277 = sbr.rel (%p275) target = $region16
        $region15: #{transformer_encoder_convlike.3} parent=11 // pred_region
          _
        $region16: #{transformer_encoder_convlike.3} parent=11 // pred_fallthru
          _
        // Predicated region
        $region17: #{transformer_encoder_convlike.3} parent=11 // pred_check
          %p278 = pneg %p87
        $region18: #{transformer_encoder_convlike.3} parent=11 // pred_check_branch
          %280 = sbr.rel (%p278) target = $region20
        $region19: #{transformer_encoder_convlike.3} parent=11 // pred_region
          _
        $region20: #{transformer_encoder_convlike.3} parent=11 // pred_fallthru
          _
        // Predicated region
        $region21: #{transformer_encoder_convlike.3} parent=11 // pred_check
          %p281 = pneg %p108
        $region22: #{transformer_encoder_convlike.3} parent=11 // pred_check_branch
          %283 = sbr.rel (%p281) target = $region24
        $region23: #{transformer_encoder_convlike.3} parent=11 // pred_region
          _
        $region24: #{transformer_encoder_convlike.3} parent=11 // pred_fallthru
          _
        // Predicated region
        $region25: #{transformer_encoder_convlike.3} parent=11 // pred_check
          %p284 = pneg %p129
        $region26: #{transformer_encoder_convlike.3} parent=11 // pred_check_branch
          %286 = sbr.rel (%p284) target = $region28
        $region27: #{transformer_encoder_convlike.3} parent=11 // pred_region
          _
        $region28: #{transformer_encoder_convlike.3} parent=11 // pred_fallthru
          _
        // Predicated region
        $region29: #{transformer_encoder_convlike.3} parent=11 // pred_check
          %p287 = pneg %p150
        $region30: #{transformer_encoder_convlike.3} parent=11 // pred_check_branch
          %289 = sbr.rel (%p287) target = $region32
        $region31: #{transformer_encoder_convlike.3} parent=11 // pred_region
          _
        $region32: #{transformer_encoder_convlike.3} parent=11 // pred_fallthru
          _
        // Predicated region
        $region33: #{transformer_encoder_convlike.3} parent=11 // pred_check
          %p290 = pneg %p171
        $region34: #{transformer_encoder_convlike.3} parent=11 // pred_check_branch
          %292 = sbr.rel (%p290) target = $region36
        $region35: #{transformer_encoder_convlike.3} parent=11 // pred_region
          _
        $region36: #{transformer_encoder_convlike.3} parent=11 // pred_fallthru
          _
        // Predicated region
        $region37: #{transformer_encoder_convlike.3} parent=11 // pred_check
          %p293 = pneg %p192
        $region38: #{transformer_encoder_convlike.3} parent=11 // pred_check_branch
          %295 = sbr.rel (%p293) target = $region40
        $region39: #{transformer_encoder_convlike.3} parent=11 // pred_region
          _
        $region40: #{transformer_encoder_convlike.3} parent=11 // pred_fallthru
          _
        // Predicated region
        $region41: #{transformer_encoder_convlike.3} parent=11 // pred_check
          %p296 = pneg %p213
        $region42: #{transformer_encoder_convlike.3} parent=11 // pred_check_branch
          %298 = sbr.rel (%p296) target = $region44
        $region43: #{transformer_encoder_convlike.3} parent=11 // pred_region
          _
        $region44: #{transformer_encoder_convlike.3} parent=11 // pred_fallthru
          _
        // Predicated region
        $region45: #{transformer_encoder_convlike.3} parent=11 // pred_check
          %p299 = pneg %p234
        $region46: #{transformer_encoder_convlike.3} parent=11 // pred_check_branch
          %301 = sbr.rel (%p299) target = $region48
        $region47: #{transformer_encoder_convlike.3} parent=11 // pred_region
          _
        $region48: #{transformer_encoder_convlike.3} parent=11 // pred_fallthru
          _
      $region12: #{transformer_encoder_convlike.3} parent=5 // pred_fallthru
        _
      %p302 = scmp.lt.s32.totalorder %s19, 2
      // Predicated region
      $region49: #{transformer_encoder_convlike.3} parent=5 // pred_check
        %p303 = pneg %p302
      $region50: #{transformer_encoder_convlike.3} parent=5 // pred_check_branch
        %305 = sbr.rel (%p303) target = $region52
      $region51: #{transformer_encoder_convlike.3} parent=5 // pred_region
        // Predicated region
        $region53: #{transformer_encoder_convlike.3} parent=51 // pred_check
          %p306 = pneg %p39
        $region54: #{transformer_encoder_convlike.3} parent=51 // pred_check_branch
          %308 = sbr.rel (%p306) target = $region56
        $region55: #{transformer_encoder_convlike.3} parent=51 // pred_region
          %s309 = smul.u32 8, %s19
          %p310 = scmp.lt.s32.totalorder %s309, 15
          %s311 = scalar_select %p310, %s309, 15
          %s312 = smul.addr %s311, 8
          %s313 = scalar_lea.vmem %s0, %s312
          %s314 = smul.u32 8, %s19
        $region56: #{transformer_encoder_convlike.3} parent=51 // pred_fallthru
          _
      $region52: #{transformer_encoder_convlike.3} parent=5 // pred_fallthru
        _
      %p315 = scmp.le.s32.totalorder 1, %s19
      %p316 = scmp.lt.s32.totalorder %s19, 3
      %p317 = pnand %p315, %p316
      %p318 = pneg %p317
      // Predicated region
      $region57: #{transformer_encoder_convlike.3} parent=5 // pred_check
        _
      $region58: #{transformer_encoder_convlike.3} parent=5 // pred_check_branch
        %320 = sbr.rel (%p317) target = $region60
      $region59: #{transformer_encoder_convlike.3} parent=5 // pred_region
        %s321 = ssub.s32 %s19, 1
        %s322 = smul.u32 8, %s24
        %p323 = scmp.lt.s32.totalorder %s322, 15
        %s324 = scalar_select %p323, %s322, 15
        %s325 = smul.addr %s324, 8
        %s326 = scalar_lea.vmem %s0, %s325
        %p327 = pneg %p45
        %p328 = pneg %p42
        %p329 = pneg %p66
        %p330 = pneg %p63
        %p331 = pneg %p87
        %p332 = pneg %p84
        %p333 = pneg %p108
        %p334 = pneg %p105
        %p335 = pneg %p129
        %p336 = pneg %p126
        %p337 = pneg %p150
        %p338 = pneg %p147
        %p339 = pneg %p171
        %p340 = pneg %p168
        %p341 = pneg %p192
        %p342 = pneg %p189
        %p343 = pneg %p213
        %p344 = pneg %p210
        %p345 = pneg %p234
        %p346 = pneg %p231
        %p347 = pneg %p260
        %p348 = pneg %p257
        %s349 = sand.u32 %s247, 1
        %s350 = scalar_lea.sflag [#allocation4], %s349
        %s351 = sand.u32 %s247, 1
        %s352 = smul.addr %s351, 64
        %s353 = scalar_lea.vmem [#allocation3], %s352
        %s354 = smul.u32 8, %s24
        %p355 = scmp.lt.s32.totalorder %s354, 15
        %s356 = scalar_select %p355, %s354, 15
        %s357 = smul.addr %s356, 8
        %s358 = scalar_lea.vmem %s0, %s357
        %s359 = smul.u32 8, %s24
        %s360 = smul.u32 8, %s24
        %v362 = vld [vmem:[%s358] sm:$0xff]
        %v363 = vld [vmem:[%s358 + $0x8] sm:$0xff]
        %v364 = vld [vmem:[%s358 + $0x10] sm:$0xff]
        %v365 = vld [vmem:[%s358 + $0x18] sm:$0xff]
        %v366 = vld [vmem:[%s358 + $0x20] sm:$0xff]
        %v367 = vld [vmem:[%s358 + $0x28] sm:$0xff]
        %v368 = vld [vmem:[%s358 + $0x30] sm:$0xff]
        %v369 = vld [vmem:[%s358 + $0x38] sm:$0xff]
        %v370 = vld [vmem:[%s1] sm:$0x1]
        %v372 = vlaneseq
        %v373 = vshrl.u32 %v372, 7
        %v374 = vsub.s32 0, %v373
        %v375 = vrot.slane %v370, %v374
        %v377 = vmul.f32 %v362, %v375
        %v378 = vmul.f32 %v363, %v375
        %v379 = vmul.f32 %v364, %v375
        %v380 = vmul.f32 %v365, %v375
        %v381 = vmul.f32 %v366, %v375
        %v382 = vmul.f32 %v367, %v375
        %v383 = vmul.f32 %v368, %v375
        %v384 = vmul.f32 %v369, %v375
        %v385 = vld [vmem:[%s2] sm:$0x1]
        %v387 = vlaneseq
        %v388 = vshrl.u32 %v387, 7
        %v389 = vsub.s32 0, %v388
        %v390 = vrot.slane %v385, %v389
        %v392 = vadd.f32 %v377, %v390
        %v393 = vadd.f32 %v378, %v390
        %v394 = vadd.f32 %v379, %v390
        %v395 = vadd.f32 %v380, %v390
        %v396 = vadd.f32 %v381, %v390
        %v397 = vadd.f32 %v382, %v390
        %v398 = vadd.f32 %v383, %v390
        %v399 = vadd.f32 %v384, %v390
        %v400 = vpack.c.bf16 %v393, %v392
        %v401 = vpack.c.bf16 %v395, %v394
        %v402 = vpack.c.bf16 %v397, %v396
        %v403 = vpack.c.bf16 %v399, %v398
        %v404 = vld [vmem:[%s3] sm:$0xf]
        %v405 = vld [vmem:[%s3 + $0x4] sm:$0xf]
        %v406 = vld [vmem:[%s4] sm:$0x1]
        %v408 = vlaneseq
        %v409 = vshrl.u32 %v408, 7
        %v410 = vsub.s32 0, %v409
        %v411 = vrot.slane %v406, %v410
        %v415 = vunpack.c.l.b16 %v404
        %v416 = vunpack.c.l.b16 %v405
        %v417 = vpack.c.b16 %v416, %v415
        %vm419 = vcmask 130048
        %v421 = vsel %vm419, %v400, 0
        %v424 = vsel %vm419, %v401, 0
        %v427 = vsel %vm419, %v402, 0
        %v430 = vsel %vm419, %v403, 0
        %432 = vmatprep.subr.bf16.mxu0 0
        %433 = vmatpush1.bf16.msra.mxu0 %v417
        %434 = vmatprep.subr.bf16.mxu0 0
        %435 = vmatpush1.bf16.msra.mxu0 0
        %436 = vmatprep.subr.bf16.mxu0 0
        %437 = vmatpush1.bf16.msra.mxu0 0
        %438 = vmatprep.subr.bf16.mxu0 0
        %439 = vmatpush1.bf16.msra.mxu0 0
        %440 = vmatprep.subr.bf16.mxu0 0
        %441 = vmatpush1.bf16.msra.mxu0 0
        %442 = vmatprep.subr.bf16.mxu0 0
        %443 = vmatpush1.bf16.msra.mxu0 0
        %444 = vmatprep.subr.bf16.mxu0 0
        %445 = vmatpush1.bf16.msra.mxu0 0
        %446 = vmatprep.subr.bf16.mxu0 0
        %447 = vmatpush1.bf16.msra.mxu0 0
        %448 = vmatprep.subr.bf16.mxu0 0
        %449 = vmatpush1.bf16.msra.mxu0 0
        %450 = vmatprep.subr.bf16.mxu0 0
        %451 = vmatpush1.bf16.msra.mxu0 0
        %452 = vmatprep.subr.bf16.mxu0 0
        %453 = vmatpush1.bf16.msra.mxu0 0
        %454 = vmatprep.subr.bf16.mxu0 0
        %455 = vmatpush1.bf16.msra.mxu0 0
        %456 = vmatprep.subr.bf16.mxu0 0
        %457 = vmatpush1.bf16.msra.mxu0 0
        %458 = vmatprep.subr.bf16.mxu0 0
        %459 = vmatpush1.bf16.msra.mxu0 0
        %460 = vmatprep.subr.bf16.mxu0 0
        %461 = vmatpush1.bf16.msra.mxu0 0
        %462 = vmatprep.subr.bf16.mxu0 0
        %463 = vmatpush1.bf16.msra.mxu0 0
        %464 = vmatprep.mubr.bf16.mxu0 0
        %465 = vmatmul.mubr.bf16.gmra.mrb[0].mxu0 %v421
        %v466 = vpop.f32.mrb[0].mxu0
        %v467 = vadd.f32 %v411, %v466
        %v468 = vpop.f32.mrb[0].mxu0
        %v469 = vpop.f32.mrb[0].mxu0
        %v470 = vadd.f32 %v411, %v469
        %v471 = vpop.f32.mrb[0].mxu0
        %472 = vmatprep.mubr.bf16.mxu0 0
        %473 = vmatmul.mubr.bf16.gmra.mrb[0].mxu0 %v424
        %v474 = vpop.f32.mrb[0].mxu0
        %v475 = vadd.f32 %v411, %v474
        %v476 = vpop.f32.mrb[0].mxu0
        %v477 = vpop.f32.mrb[0].mxu0
        %v478 = vadd.f32 %v411, %v477
        %v479 = vpop.f32.mrb[0].mxu0
        %480 = vmatprep.mubr.bf16.mxu0 0
        %481 = vmatmul.mubr.bf16.gmra.mrb[0].mxu0 %v427
        %v482 = vpop.f32.mrb[0].mxu0
        %v483 = vadd.f32 %v411, %v482
        %v484 = vpop.f32.mrb[0].mxu0
        %v485 = vpop.f32.mrb[0].mxu0
        %v486 = vadd.f32 %v411, %v485
        %v487 = vpop.f32.mrb[0].mxu0
        %488 = vmatprep.mubr.bf16.mxu0 0
        %489 = vmatmul.mubr.bf16.gmra.mrb[0].mxu0 %v430
        %v490 = vpop.f32.mrb[0].mxu0
        %v491 = vadd.f32 %v411, %v490
        %v492 = vpop.f32.mrb[0].mxu0
        %v493 = vpop.f32.mrb[0].mxu0
        %v494 = vadd.f32 %v411, %v493
        %v495 = vpop.f32.mrb[0].mxu0
        %496 = vdwg.mxu0
        %v497 = vmul.f32 %v467, %v467
        %v498 = vmul.f32 %v470, %v470
        %v499 = vmul.f32 %v475, %v475
        %v500 = vmul.f32 %v478, %v478
        %v501 = vmul.f32 %v483, %v483
        %v502 = vmul.f32 %v486, %v486
        %v503 = vmul.f32 %v491, %v491
        %v504 = vmul.f32 %v494, %v494
        %v505 = vmul.f32 %v467, %v497
        %v506 = vmul.f32 %v470, %v498
        %v507 = vmul.f32 %v475, %v499
        %v508 = vmul.f32 %v478, %v500
        %v509 = vmul.f32 %v483, %v501
        %v510 = vmul.f32 %v486, %v502
        %v511 = vmul.f32 %v491, %v503
        %v512 = vmul.f32 %v494, %v504
        %v513 = vmul.f32 %v505, 0.044715
        %v514 = vmul.f32 %v506, 0.044715
        %v515 = vmul.f32 %v507, 0.044715
        %v516 = vmul.f32 %v508, 0.044715
        %v517 = vmul.f32 %v509, 0.044715
        %v518 = vmul.f32 %v510, 0.044715
        %v519 = vmul.f32 %v511, 0.044715
        %v520 = vmul.f32 %v512, 0.044715
        %v521 = vadd.f32 %v467, %v513
        %v522 = vadd.f32 %v470, %v514
        %v523 = vadd.f32 %v475, %v515
        %v524 = vadd.f32 %v478, %v516
        %v525 = vadd.f32 %v483, %v517
        %v526 = vadd.f32 %v486, %v518
        %v527 = vadd.f32 %v491, %v519
        %v528 = vadd.f32 %v494, %v520
        %v529 = vmul.f32 %v521, 0.7978846
        %v530 = vmul.f32 %v522, 0.7978846
        %v531 = vmul.f32 %v523, 0.7978846
        %v532 = vmul.f32 %v524, 0.7978846
        %v533 = vmul.f32 %v525, 0.7978846
        %v534 = vmul.f32 %v526, 0.7978846
        %v535 = vmul.f32 %v527, 0.7978846
        %v536 = vmul.f32 %v528, 0.7978846
        %v537 = vtanh.pop %v529
        %v538 = vtanh.pop %v530
        %v539 = vtanh.pop %v531
        %v540 = vtanh.pop %v532
        %v541 = vtanh.pop %v533
        %v542 = vtanh.pop %v534
        %v543 = vtanh.pop %v535
        %v544 = vtanh.pop %v536
        %v545 = vadd.f32 %v537, 1.0
        %v546 = vadd.f32 %v538, 1.0
        %v547 = vadd.f32 %v539, 1.0
        %v548 = vadd.f32 %v540, 1.0
        %v549 = vadd.f32 %v541, 1.0
        %v550 = vadd.f32 %v542, 1.0
        %v551 = vadd.f32 %v543, 1.0
        %v552 = vadd.f32 %v544, 1.0
        %v553 = vmul.f32 %v545, 0.5
        %v554 = vmul.f32 %v546, 0.5
        %v555 = vmul.f32 %v547, 0.5
        %v556 = vmul.f32 %v548, 0.5
        %v557 = vmul.f32 %v549, 0.5
        %v558 = vmul.f32 %v550, 0.5
        %v559 = vmul.f32 %v551, 0.5
        %v560 = vmul.f32 %v552, 0.5
        %v561 = vmul.f32 %v467, %v553
        %v562 = vmul.f32 %v470, %v554
        %v563 = vmul.f32 %v475, %v555
        %v564 = vmul.f32 %v478, %v556
        %v565 = vmul.f32 %v483, %v557
        %v566 = vmul.f32 %v486, %v558
        %v567 = vmul.f32 %v491, %v559
        %v568 = vmul.f32 %v494, %v560
        %vm569 = vcmask 261120
        %570 = vst.msk [vmem:[#allocation2] sm:$0xff] %vm569, 0.0
        %vm571 = vcmask 254976
        %572 = vst.msk [vmem:[#allocation2 + $0x8] sm:$0x3] %vm571, 0.0
        %573 = vst.msk [vmem:[#allocation2 + $0x10] sm:$0xff] %vm569, 0.0
        %574 = vst.msk [vmem:[#allocation2 + $0x18] sm:$0x3] %vm571, 0.0
        %575 = vst.msk [vmem:[#allocation2 + $0x20] sm:$0xff] %vm569, 0.0
        %576 = vst.msk [vmem:[#allocation2 + $0x28] sm:$0x3] %vm571, 0.0
        %577 = vst.msk [vmem:[#allocation2 + $0x30] sm:$0xff] %vm569, 0.0
        %578 = vst.msk [vmem:[#allocation2 + $0x38] sm:$0x3] %vm571, 0.0
        %579 = vst.msk [vmem:[#allocation2 + $0x40] sm:$0xff] %vm569, 0.0
        %580 = vst.msk [vmem:[#allocation2 + $0x48] sm:$0x3] %vm571, 0.0
        %581 = vst.msk [vmem:[#allocation2 + $0x50] sm:$0xff] %vm569, 0.0
        %582 = vst.msk [vmem:[#allocation2 + $0x58] sm:$0x3] %vm571, 0.0
        %583 = vst.msk [vmem:[#allocation2 + $0x60] sm:$0xff] %vm569, 0.0
        %584 = vst.msk [vmem:[#allocation2 + $0x68] sm:$0x3] %vm571, 0.0
        %585 = vst.msk [vmem:[#allocation2 + $0x70] sm:$0xff] %vm569, 0.0
        %586 = vst.msk [vmem:[#allocation2 + $0x78] sm:$0x3] %vm571, 0.0
        %587 = vst.msk [vmem:[#allocation2 + $0x80] sm:$0xff] %vm569, 0.0
        %588 = vst.msk [vmem:[#allocation2 + $0x88] sm:$0x3] %vm571, 0.0
        %589 = vst.msk [vmem:[#allocation2 + $0x90] sm:$0xff] %vm569, 0.0
        %590 = vst.msk [vmem:[#allocation2 + $0x98] sm:$0x3] %vm571, 0.0
        %s591 = scalar_lea.vmem [#allocation2], 16
        %592 = vst.msk [vmem:[%s591 + $0x1] sm:$0xff] %vm569, %v561
        %593 = vst.msk [vmem:[%s591 + $0x11] sm:$0xff] %vm569, %v562
        %594 = vst.msk [vmem:[%s591 + $0x21] sm:$0xff] %vm569, %v563
        %595 = vst.msk [vmem:[%s591 + $0x31] sm:$0xff] %vm569, %v564
        %596 = vst.msk [vmem:[%s591 + $0x41] sm:$0xff] %vm569, %v565
        %597 = vst.msk [vmem:[%s591 + $0x51] sm:$0xff] %vm569, %v566
        %598 = vst.msk [vmem:[%s591 + $0x61] sm:$0xff] %vm569, %v567
        %599 = vst.msk [vmem:[%s591 + $0x71] sm:$0xff] %vm569, %v568
        %v600 = vld [vmem:[%s5] sm:$0x7]
        %v601 = vld [vmem:[%s5 + $0x4] sm:$0x7]
        %v602 = vld [vmem:[%s5 + $0x8] sm:$0x7]
        %v603 = vld [vmem:[#allocation2] sm:$0xff]
        %v604 = vld [vmem:[#allocation2 + $0x10] sm:$0xff]
        %v605 = vld [vmem:[#allocation2 + $0x20] sm:$0xff]
        %v606 = vld [vmem:[#allocation2 + $0x30] sm:$0xff]
        %v607 = vld [vmem:[#allocation2 + $0x40] sm:$0xff]
        %v608 = vld [vmem:[#allocation2 + $0x50] sm:$0xff]
        %v609 = vld [vmem:[#allocation2 + $0x60] sm:$0xff]
        %v610 = vld [vmem:[#allocation2 + $0x70] sm:$0xff]
        %v611 = vlaneseq
        %v612 = vshrl.u32 %v611, 7
        %v613 = vsub.s32 0, %v612
        %v614 = vrot.slane %v600, %v613
        %v615 = vmul.f32 %v603, %v614
        %v616 = vmul.f32 %v604, %v614
        %v617 = vmul.f32 %v605, %v614
        %v618 = vmul.f32 %v606, %v614
        %v619 = vmul.f32 %v607, %v614
        %v620 = vmul.f32 %v608, %v614
        %v621 = vmul.f32 %v609, %v614
        %v622 = vmul.f32 %v610, %v614
        %v623 = vadd.f32 %v615, 0.0
        %v624 = vadd.f32 %v616, 0.0
        %v625 = vadd.f32 %v617, 0.0
        %v626 = vadd.f32 %v618, 0.0
        %v627 = vadd.f32 %v619, 0.0
        %v628 = vadd.f32 %v620, 0.0
        %v629 = vadd.f32 %v621, 0.0
        %v630 = vadd.f32 %v622, 0.0
        %v631 = vld [vmem:[#allocation2 + $0x1] sm:$0xff]
        %v632 = vld [vmem:[#allocation2 + $0x11] sm:$0xff]
        %v633 = vld [vmem:[#allocation2 + $0x21] sm:$0xff]
        %v634 = vld [vmem:[#allocation2 + $0x31] sm:$0xff]
        %v635 = vld [vmem:[#allocation2 + $0x41] sm:$0xff]
        %v636 = vld [vmem:[#allocation2 + $0x51] sm:$0xff]
        %v637 = vld [vmem:[#allocation2 + $0x61] sm:$0xff]
        %v638 = vld [vmem:[#allocation2 + $0x71] sm:$0xff]
        %v639 = vlaneseq
        %v640 = vshrl.u32 %v639, 7
        %v641 = vsub.s32 1, %v640
        %v642 = vrot.slane %v600, %v641
        %v643 = vmul.f32 %v631, %v642
        %v644 = vmul.f32 %v632, %v642
        %v645 = vmul.f32 %v633, %v642
        %v646 = vmul.f32 %v634, %v642
        %v647 = vmul.f32 %v635, %v642
        %v648 = vmul.f32 %v636, %v642
        %v649 = vmul.f32 %v637, %v642
        %v650 = vmul.f32 %v638, %v642
        %v651 = vadd.f32 %v623, %v643
        %v652 = vadd.f32 %v624, %v644
        %v653 = vadd.f32 %v625, %v645
        %v654 = vadd.f32 %v626, %v646
        %v655 = vadd.f32 %v627, %v647
        %v656 = vadd.f32 %v628, %v648
        %v657 = vadd.f32 %v629, %v649
        %v658 = vadd.f32 %v630, %v650
        %v659 = vld [vmem:[#allocation2 + $0x2] sm:$0xff]
        %v660 = vld [vmem:[#allocation2 + $0x12] sm:$0xff]
        %v661 = vld [vmem:[#allocation2 + $0x22] sm:$0xff]
        %v662 = vld [vmem:[#allocation2 + $0x32] sm:$0xff]
        %v663 = vld [vmem:[#allocation2 + $0x42] sm:$0xff]
        %v664 = vld [vmem:[#allocation2 + $0x52] sm:$0xff]
        %v665 = vld [vmem:[#allocation2 + $0x62] sm:$0xff]
        %v666 = vld [vmem:[#allocation2 + $0x72] sm:$0xff]
        %v667 = vlaneseq
        %v668 = vshrl.u32 %v667, 7
        %v669 = vsub.s32 2, %v668
        %v670 = vrot.slane %v600, %v669
        %v671 = vmul.f32 %v659, %v670
        %v672 = vmul.f32 %v660, %v670
        %v673 = vmul.f32 %v661, %v670
        %v674 = vmul.f32 %v662, %v670
        %v675 = vmul.f32 %v663, %v670
        %v676 = vmul.f32 %v664, %v670
        %v677 = vmul.f32 %v665, %v670
        %v678 = vmul.f32 %v666, %v670
        %v679 = vadd.f32 %v651, %v671
        %v680 = vadd.f32 %v652, %v672
        %v681 = vadd.f32 %v653, %v673
        %v682 = vadd.f32 %v654, %v674
        %v683 = vadd.f32 %v655, %v675
        %v684 = vadd.f32 %v656, %v676
        %v685 = vadd.f32 %v657, %v677
        %v686 = vadd.f32 %v658, %v678
        %v687 = vld [vmem:[%s591] sm:$0xff]
        %v688 = vld [vmem:[%s591 + $0x10] sm:$0xff]
        %v689 = vld [vmem:[%s591 + $0x20] sm:$0xff]
        %v690 = vld [vmem:[%s591 + $0x30] sm:$0xff]
        %v691 = vld [vmem:[%s591 + $0x40] sm:$0xff]
        %v692 = vld [vmem:[%s591 + $0x50] sm:$0xff]
        %v693 = vld [vmem:[%s591 + $0x60] sm:$0xff]
        %v694 = vld [vmem:[%s591 + $0x70] sm:$0xff]
        %v695 = vlaneseq
        %v696 = vshrl.u32 %v695, 7
        %v697 = vsub.s32 0, %v696
        %v698 = vrot.slane %v601, %v697
        %v699 = vmul.f32 %v687, %v698
        %v700 = vmul.f32 %v688, %v698
        %v701 = vmul.f32 %v689, %v698
        %v702 = vmul.f32 %v690, %v698
        %v703 = vmul.f32 %v691, %v698
        %v704 = vmul.f32 %v692, %v698
        %v705 = vmul.f32 %v693, %v698
        %v706 = vmul.f32 %v694, %v698
        %v707 = vadd.f32 %v679, %v699
        %v708 = vadd.f32 %v680, %v700
        %v709 = vadd.f32 %v681, %v701
        %v710 = vadd.f32 %v682, %v702
        %v711 = vadd.f32 %v683, %v703
        %v712 = vadd.f32 %v684, %v704
        %v713 = vadd.f32 %v685, %v705
        %v714 = vadd.f32 %v686, %v706
        %v715 = vld [vmem:[%s591 + $0x1] sm:$0xff]
        %v716 = vld [vmem:[%s591 + $0x11] sm:$0xff]
        %v717 = vld [vmem:[%s591 + $0x21] sm:$0xff]
        %v718 = vld [vmem:[%s591 + $0x31] sm:$0xff]
        %v719 = vld [vmem:[%s591 + $0x41] sm:$0xff]
        %v720 = vld [vmem:[%s591 + $0x51] sm:$0xff]
        %v721 = vld [vmem:[%s591 + $0x61] sm:$0xff]
        %v722 = vld [vmem:[%s591 + $0x71] sm:$0xff]
        %v723 = vlaneseq
        %v724 = vshrl.u32 %v723, 7
        %v725 = vsub.s32 1, %v724
        %v726 = vrot.slane %v601, %v725
        %v727 = vmul.f32 %v715, %v726
        %v728 = vmul.f32 %v716, %v726
        %v729 = vmul.f32 %v717, %v726
        %v730 = vmul.f32 %v718, %v726
        %v731 = vmul.f32 %v719, %v726
        %v732 = vmul.f32 %v720, %v726
        %v733 = vmul.f32 %v721, %v726
        %v734 = vmul.f32 %v722, %v726
        %v735 = vadd.f32 %v707, %v727
        %v736 = vadd.f32 %v708, %v728
        %v737 = vadd.f32 %v709, %v729
        %v738 = vadd.f32 %v710, %v730
        %v739 = vadd.f32 %v711, %v731
        %v740 = vadd.f32 %v712, %v732
        %v741 = vadd.f32 %v713, %v733
        %v742 = vadd.f32 %v714, %v734
        %v743 = vld [vmem:[%s591 + $0x2] sm:$0xff]
        %v744 = vld [vmem:[%s591 + $0x12] sm:$0xff]
        %v745 = vld [vmem:[%s591 + $0x22] sm:$0xff]
        %v746 = vld [vmem:[%s591 + $0x32] sm:$0xff]
        %v747 = vld [vmem:[%s591 + $0x42] sm:$0xff]
        %v748 = vld [vmem:[%s591 + $0x52] sm:$0xff]
        %v749 = vld [vmem:[%s591 + $0x62] sm:$0xff]
        %v750 = vld [vmem:[%s591 + $0x72] sm:$0xff]
        %v751 = vlaneseq
        %v752 = vshrl.u32 %v751, 7
        %v753 = vsub.s32 2, %v752
        %v754 = vrot.slane %v601, %v753
        %v755 = vmul.f32 %v743, %v754
        %v756 = vmul.f32 %v744, %v754
        %v757 = vmul.f32 %v745, %v754
        %v758 = vmul.f32 %v746, %v754
        %v759 = vmul.f32 %v747, %v754
        %v760 = vmul.f32 %v748, %v754
        %v761 = vmul.f32 %v749, %v754
        %v762 = vmul.f32 %v750, %v754
        %v763 = vadd.f32 %v735, %v755
        %v764 = vadd.f32 %v736, %v756
        %v765 = vadd.f32 %v737, %v757
        %v766 = vadd.f32 %v738, %v758
        %v767 = vadd.f32 %v739, %v759
        %v768 = vadd.f32 %v740, %v760
        %v769 = vadd.f32 %v741, %v761
        %v770 = vadd.f32 %v742, %v762
        %s771 = scalar_lea.vmem [#allocation2], 32
        %v772 = vld [vmem:[%s771] sm:$0xff]
        %v773 = vld [vmem:[%s771 + $0x10] sm:$0xff]
        %v774 = vld [vmem:[%s771 + $0x20] sm:$0xff]
        %v775 = vld [vmem:[%s771 + $0x30] sm:$0xff]
        %v776 = vld [vmem:[%s771 + $0x40] sm:$0xff]
        %v777 = vld [vmem:[%s771 + $0x50] sm:$0xff]
        %v778 = vld [vmem:[%s771 + $0x60] sm:$0xff]
        %v779 = vld [vmem:[%s771 + $0x70] sm:$0xff]
        %v780 = vlaneseq
        %v781 = vshrl.u32 %v780, 7
        %v782 = vsub.s32 0, %v781
        %v783 = vrot.slane %v602, %v782
        %v784 = vmul.f32 %v772, %v783
        %v785 = vmul.f32 %v773, %v783
        %v786 = vmul.f32 %v774, %v783
        %v787 = vmul.f32 %v775, %v783
        %v788 = vmul.f32 %v776, %v783
        %v789 = vmul.f32 %v777, %v783
        %v790 = vmul.f32 %v778, %v783
        %v791 = vmul.f32 %v779, %v783
        %v792 = vadd.f32 %v763, %v784
        %v793 = vadd.f32 %v764, %v785
        %v794 = vadd.f32 %v765, %v786
        %v795 = vadd.f32 %v766, %v787
        %v796 = vadd.f32 %v767, %v788
        %v797 = vadd.f32 %v768, %v789
        %v798 = vadd.f32 %v769, %v790
        %v799 = vadd.f32 %v770, %v791
        %v800 = vld [vmem:[%s771 + $0x1] sm:$0xff]
        %v801 = vld [vmem:[%s771 + $0x11] sm:$0xff]
        %v802 = vld [vmem:[%s771 + $0x21] sm:$0xff]
        %v803 = vld [vmem:[%s771 + $0x31] sm:$0xff]
        %v804 = vld [vmem:[%s771 + $0x41] sm:$0xff]
        %v805 = vld [vmem:[%s771 + $0x51] sm:$0xff]
        %v806 = vld [vmem:[%s771 + $0x61] sm:$0xff]
        %v807 = vld [vmem:[%s771 + $0x71] sm:$0xff]
        %v808 = vlaneseq
        %v809 = vshrl.u32 %v808, 7
        %v810 = vsub.s32 1, %v809
        %v811 = vrot.slane %v602, %v810
        %v812 = vmul.f32 %v800, %v811
        %v813 = vmul.f32 %v801, %v811
        %v814 = vmul.f32 %v802, %v811
        %v815 = vmul.f32 %v803, %v811
        %v816 = vmul.f32 %v804, %v811
        %v817 = vmul.f32 %v805, %v811
        %v818 = vmul.f32 %v806, %v811
        %v819 = vmul.f32 %v807, %v811
        %v820 = vadd.f32 %v792, %v812
        %v821 = vadd.f32 %v793, %v813
        %v822 = vadd.f32 %v794, %v814
        %v823 = vadd.f32 %v795, %v815
        %v824 = vadd.f32 %v796, %v816
        %v825 = vadd.f32 %v797, %v817
        %v826 = vadd.f32 %v798, %v818
        %v827 = vadd.f32 %v799, %v819
        %v828 = vld [vmem:[%s771 + $0x2] sm:$0xff]
        %v829 = vld [vmem:[%s771 + $0x12] sm:$0xff]
        %v830 = vld [vmem:[%s771 + $0x22] sm:$0xff]
        %v831 = vld [vmem:[%s771 + $0x32] sm:$0xff]
        %v832 = vld [vmem:[%s771 + $0x42] sm:$0xff]
        %v833 = vld [vmem:[%s771 + $0x52] sm:$0xff]
        %v834 = vld [vmem:[%s771 + $0x62] sm:$0xff]
        %v835 = vld [vmem:[%s771 + $0x72] sm:$0xff]
        %v836 = vlaneseq
        %v837 = vshrl.u32 %v836, 7
        %v838 = vsub.s32 2, %v837
        %v839 = vrot.slane %v602, %v838
        %v840 = vmul.f32 %v828, %v839
        %v841 = vmul.f32 %v829, %v839
        %v842 = vmul.f32 %v830, %v839
        %v843 = vmul.f32 %v831, %v839
        %v844 = vmul.f32 %v832, %v839
        %v845 = vmul.f32 %v833, %v839
        %v846 = vmul.f32 %v834, %v839
        %v847 = vmul.f32 %v835, %v839
        %v848 = vadd.f32 %v820, %v840
        %v849 = vadd.f32 %v821, %v841
        %v850 = vadd.f32 %v822, %v842
        %v851 = vadd.f32 %v823, %v843
        %v852 = vadd.f32 %v824, %v844
        %v853 = vadd.f32 %v825, %v845
        %v854 = vadd.f32 %v826, %v846
        %v855 = vadd.f32 %v827, %v847
        %v856 = vld [vmem:[%s6] sm:$0x1]
        %v858 = vlaneseq
        %v859 = vshrl.u32 %v858, 7
        %v860 = vsub.s32 0, %v859
        %v861 = vrot.slane %v856, %v860
        %v863 = vadd.f32 %v848, %v861
        %v864 = vadd.f32 %v849, %v861
        %v865 = vadd.f32 %v850, %v861
        %v866 = vadd.f32 %v851, %v861
        %v867 = vadd.f32 %v852, %v861
        %v868 = vadd.f32 %v853, %v861
        %v869 = vadd.f32 %v854, %v861
        %v870 = vadd.f32 %v855, %v861
        %v871 = vmul.f32 %v863, %v863
        %v872 = vmul.f32 %v864, %v864
        %v873 = vmul.f32 %v865, %v865
        %v874 = vmul.f32 %v866, %v866
        %v875 = vmul.f32 %v867, %v867
        %v876 = vmul.f32 %v868, %v868
        %v877 = vmul.f32 %v869, %v869
        %v878 = vmul.f32 %v870, %v870
        %v879 = vmul.f32 %v863, %v871
        %v880 = vmul.f32 %v864, %v872
        %v881 = vmul.f32 %v865, %v873
        %v882 = vmul.f32 %v866, %v874
        %v883 = vmul.f32 %v867, %v875
        %v884 = vmul.f32 %v868, %v876
        %v885 = vmul.f32 %v869, %v877
        %v886 = vmul.f32 %v870, %v878
        %v887 = vmul.f32 %v879, 0.044715
        %v888 = vmul.f32 %v880, 0.044715
        %v889 = vmul.f32 %v881, 0.044715
        %v890 = vmul.f32 %v882, 0.044715
        %v891 = vmul.f32 %v883, 0.044715
        %v892 = vmul.f32 %v884, 0.044715
        %v893 = vmul.f32 %v885, 0.044715
        %v894 = vmul.f32 %v886, 0.044715
        %v895 = vadd.f32 %v863, %v887
        %v896 = vadd.f32 %v864, %v888
        %v897 = vadd.f32 %v865, %v889
        %v898 = vadd.f32 %v866, %v890
        %v899 = vadd.f32 %v867, %v891
        %v900 = vadd.f32 %v868, %v892
        %v901 = vadd.f32 %v869, %v893
        %v902 = vadd.f32 %v870, %v894
        %v903 = vmul.f32 %v895, 0.7978846
        %v904 = vmul.f32 %v896, 0.7978846
        %v905 = vmul.f32 %v897, 0.7978846
        %v906 = vmul.f32 %v898, 0.7978846
        %v907 = vmul.f32 %v899, 0.7978846
        %v908 = vmul.f32 %v900, 0.7978846
        %v909 = vmul.f32 %v901, 0.7978846
        %v910 = vmul.f32 %v902, 0.7978846
        %v911 = vtanh.pop %v903
        %v912 = vtanh.pop %v904
        %v913 = vtanh.pop %v905
        %v914 = vtanh.pop %v906
        %v915 = vtanh.pop %v907
        %v916 = vtanh.pop %v908
        %v917 = vtanh.pop %v909
        %v918 = vtanh.pop %v910
        %v919 = vadd.f32 %v911, 1.0
        %v920 = vadd.f32 %v912, 1.0
        %v921 = vadd.f32 %v913, 1.0
        %v922 = vadd.f32 %v914, 1.0
        %v923 = vadd.f32 %v915, 1.0
        %v924 = vadd.f32 %v916, 1.0
        %v925 = vadd.f32 %v917, 1.0
        %v926 = vadd.f32 %v918, 1.0
        %v927 = vmul.f32 %v919, 0.5
        %v928 = vmul.f32 %v920, 0.5
        %v929 = vmul.f32 %v921, 0.5
        %v930 = vmul.f32 %v922, 0.5
        %v931 = vmul.f32 %v923, 0.5
        %v932 = vmul.f32 %v924, 0.5
        %v933 = vmul.f32 %v925, 0.5
        %v934 = vmul.f32 %v926, 0.5
        %v935 = vmul.f32 %v863, %v927
        %v936 = vmul.f32 %v864, %v928
        %v937 = vmul.f32 %v865, %v929
        %v938 = vmul.f32 %v866, %v930
        %v939 = vmul.f32 %v867, %v931
        %v940 = vmul.f32 %v868, %v932
        %v941 = vmul.f32 %v869, %v933
        %v942 = vmul.f32 %v870, %v934
        %v943 = vpack.c.bf16 %v936, %v935
        %v944 = vpack.c.bf16 %v938, %v937
        %v945 = vpack.c.bf16 %v940, %v939
        %v946 = vpack.c.bf16 %v942, %v941
        %v947 = vld [vmem:[%s7] sm:$0xf]
        %v948 = vld [vmem:[%s7 + $0x4] sm:$0xf]
        %v949 = vld [vmem:[%s7 + $0x8] sm:$0xf]
        %v950 = vld [vmem:[%s7 + $0xc] sm:$0xf]
        %v951 = vld [vmem:[%s8] sm:$0x1]
        %v953 = vlaneseq
        %v954 = vshrl.u32 %v953, 7
        %v955 = vsub.s32 0, %v954
        %v956 = vrot.slane %v951, %v955
        %v962 = vunpack.c.l.b16 %v947
        %v963 = vunpack.c.l.b16 %v948
        %v964 = vunpack.c.l.b16 %v949
        %v965 = vunpack.c.l.b16 %v950
        %v966 = vpack.c.b16 %v963, %v962
        %v967 = vpack.c.b16 %v965, %v964
        %v971 = vsel %vm569, %v943, 0
        %v974 = vsel %vm569, %v944, 0
        %v977 = vsel %vm569, %v945, 0
        %v980 = vsel %vm569, %v946, 0
        %982 = vmatprep.subr.bf16.mxu0 0
        %983 = vmatpush1.bf16.msra.mxu0 %v966
        %984 = vmatprep.subr.bf16.mxu0 0
        %985 = vmatpush1.bf16.msra.mxu0 %v967
        %986 = vmatprep.subr.bf16.mxu0 0
        %987 = vmatpush1.bf16.msra.mxu0 0
        %988 = vmatprep.subr.bf16.mxu0 0
        %989 = vmatpush1.bf16.msra.mxu0 0
        %990 = vmatprep.subr.bf16.mxu0 0
        %991 = vmatpush1.bf16.msra.mxu0 0
        %992 = vmatprep.subr.bf16.mxu0 0
        %993 = vmatpush1.bf16.msra.mxu0 0
        %994 = vmatprep.subr.bf16.mxu0 0
        %995 = vmatpush1.bf16.msra.mxu0 0
        %996 = vmatprep.subr.bf16.mxu0 0
        %997 = vmatpush1.bf16.msra.mxu0 0
        %998 = vmatprep.subr.bf16.mxu0 0
        %999 = vmatpush1.bf16.msra.mxu0 0
        %1000 = vmatprep.subr.bf16.mxu0 0
        %1001 = vmatpush1.bf16.msra.mxu0 0
        %1002 = vmatprep.subr.bf16.mxu0 0
        %1003 = vmatpush1.bf16.msra.mxu0 0
        %1004 = vmatprep.subr.bf16.mxu0 0
        %1005 = vmatpush1.bf16.msra.mxu0 0
        %1006 = vmatprep.subr.bf16.mxu0 0
        %1007 = vmatpush1.bf16.msra.mxu0 0
        %1008 = vmatprep.subr.bf16.mxu0 0
        %1009 = vmatpush1.bf16.msra.mxu0 0
        %1010 = vmatprep.subr.bf16.mxu0 0
        %1011 = vmatpush1.bf16.msra.mxu0 0
        %1012 = vmatprep.subr.bf16.mxu0 0
        %1013 = vmatpush1.bf16.msra.mxu0 0
        %1014 = vmatprep.mubr.bf16.mxu0 0
        %1015 = vmatmul.mubr.bf16.gmra.mrb[0].mxu0 %v971
        %v1016 = vpop.f32.mrb[0].mxu0
        %v1017 = vadd.f32 %v956, %v1016
        %v1018 = vpop.f32.mrb[0].mxu0
        %v1019 = vpop.f32.mrb[0].mxu0
        %v1020 = vadd.f32 %v956, %v1019
        %v1021 = vpop.f32.mrb[0].mxu0
        %1022 = vmatprep.mubr.bf16.mxu0 0
        %1023 = vmatmul.mubr.bf16.gmra.mrb[0].mxu0 %v974
        %v1024 = vpop.f32.mrb[0].mxu0
        %v1025 = vadd.f32 %v956, %v1024
        %v1026 = vpop.f32.mrb[0].mxu0
        %v1027 = vpop.f32.mrb[0].mxu0
        %v1028 = vadd.f32 %v956, %v1027
        %v1029 = vpop.f32.mrb[0].mxu0
        %1030 = vmatprep.mubr.bf16.mxu0 0
        %1031 = vmatmul.mubr.bf16.gmra.mrb[0].mxu0 %v977
        %v1032 = vpop.f32.mrb[0].mxu0
        %v1033 = vadd.f32 %v956, %v1032
        %v1034 = vpop.f32.mrb[0].mxu0
        %v1035 = vpop.f32.mrb[0].mxu0
        %v1036 = vadd.f32 %v956, %v1035
        %v1037 = vpop.f32.mrb[0].mxu0
        %1038 = vmatprep.mubr.bf16.mxu0 0
        %1039 = vmatmul.mubr.bf16.gmra.mrb[0].mxu0 %v980
        %v1040 = vpop.f32.mrb[0].mxu0
        %v1041 = vadd.f32 %v956, %v1040
        %v1042 = vpop.f32.mrb[0].mxu0
        %v1043 = vpop.f32.mrb[0].mxu0
        %v1044 = vadd.f32 %v956, %v1043
        %v1045 = vpop.f32.mrb[0].mxu0
        %1046 = vdwg.mxu0
        %v1047 = vld [vmem:[%s9] sm:$0x1]
        %v1049 = vlaneseq
        %v1050 = vshrl.u32 %v1049, 7
        %v1051 = vsub.s32 0, %v1050
        %v1052 = vrot.slane %v1047, %v1051
        %v1054 = vmul.f32 %v1052, %v1017
        %v1055 = vmul.f32 %v1052, %v1020
        %v1056 = vmul.f32 %v1052, %v1025
        %v1057 = vmul.f32 %v1052, %v1028
        %v1058 = vmul.f32 %v1052, %v1033
        %v1059 = vmul.f32 %v1052, %v1036
        %v1060 = vmul.f32 %v1052, %v1041
        %v1061 = vmul.f32 %v1052, %v1044
        %v1062 = vadd.f32 %v362, %v1054
        %v1063 = vadd.f32 %v363, %v1055
        %v1064 = vadd.f32 %v364, %v1056
        %v1065 = vadd.f32 %v365, %v1057
        %v1066 = vadd.f32 %v366, %v1058
        %v1067 = vadd.f32 %v367, %v1059
        %v1068 = vadd.f32 %v368, %v1060
        %v1069 = vadd.f32 %v369, %v1061
        %1070 = vst.msk [vmem:[%s353] sm:$0xff] %vm419, %v1062
        %1071 = vst.msk [vmem:[%s353 + $0x8] sm:$0xff] %vm419, %v1063
        %1072 = vst.msk [vmem:[%s353 + $0x10] sm:$0xff] %vm419, %v1064
        %1073 = vst.msk [vmem:[%s353 + $0x18] sm:$0xff] %vm419, %v1065
        %1074 = vst.msk [vmem:[%s353 + $0x20] sm:$0xff] %vm419, %v1066
        %1075 = vst.msk [vmem:[%s353 + $0x28] sm:$0xff] %vm419, %v1067
        %1076 = vst.msk [vmem:[%s353 + $0x30] sm:$0xff] %vm419, %v1068
        %1077 = vst.msk [vmem:[%s353 + $0x38] sm:$0xff] %vm419, %v1069
        %s1078 = sand.u32 %s247, 1
        %s1079 = scalar_lea.sflag [#allocation4], %s1078
        %s1080 = sand.u32 %s247, 1
        %s1081 = smul.addr %s1080, 64
        %s1082 = scalar_lea.vmem [#allocation3], %s1081
        // Predicated region
        $region61: #{transformer_encoder_convlike.3} parent=59 // pred_check
          %p1083 = pneg %p257
        $region62: #{transformer_encoder_convlike.3} parent=59 // pred_check_branch
          %1085 = sbr.rel (%p1083) target = $region64
        $region63: #{transformer_encoder_convlike.3} parent=59 // pred_region
          %s1086 = smul.u32 8, %s24
          %s1088 = ssub.s32 1024, 1024
          %1089 = vsyncadd %s1079, %s1088
          %s1090 = smul.addr %s1086, 128
          %s1091 = scalar_lea.hbm %s10, %s1090
          %s1092 = sshll.u32 %s1082, 4
          %s1093 = int_to_ptr.vmem [resolvable:$true] %s1092
          %1098 = dma.vmem_to_hbm [thread:$0]  %s1093, 1024, %s1091, %s1079, 128, 128, 8
        $region64: #{transformer_encoder_convlike.3} parent=59 // pred_fallthru
          _
      $region60: #{transformer_encoder_convlike.3} parent=5 // pred_fallthru
        _
      %p1099 = scmp.le.s32.totalorder 2, %s19
      // Predicated region
      $region65: #{transformer_encoder_convlike.3} parent=5 // pred_check
        %p1100 = pneg %p1099
      $region66: #{transformer_encoder_convlike.3} parent=5 // pred_check_branch
        %1102 = sbr.rel (%p1100) target = $region68
      $region67: #{transformer_encoder_convlike.3} parent=5 // pred_region
        %s1103 = ssub.s32 %s19, 2
        // Predicated region
        $region69: #{transformer_encoder_convlike.3} parent=67 // pred_check
          %p1104 = pneg %p263
        $region70: #{transformer_encoder_convlike.3} parent=67 // pred_check_branch
          %1106 = sbr.rel (%p1104) target = $region72
        $region71: #{transformer_encoder_convlike.3} parent=67 // pred_region
          %s1107 = sand.u32 %s248, 1
          %s1108 = scalar_lea.sflag [#allocation4], %s1107
          %s1109 = sand.u32 %s248, 1
          %s1110 = smul.addr %s1109, 64
          %s1111 = scalar_lea.vmem [#allocation3], %s1110
          %1112 = dma.done %s1108, 1024
        $region72: #{transformer_encoder_convlike.3} parent=67 // pred_fallthru
          _
      $region68: #{transformer_encoder_convlike.3} parent=5 // pred_fallthru
        _
    $region6: #{transformer_encoder_convlike.3} parent=1 // loop_footer
      %s23 = sadd.s32 1, %s19
    $region7: #{transformer_encoder_convlike.3} parent=1 // loop_footer_branch
      %18 = sbr.rel target = $region3
    $region8: #{transformer_encoder_convlike.3} parent=1 // loop_exit
      _
    %1113 = vsyncpa [#allocation4], 1
    %s1114 = scalar_lea.sflag [#allocation4], 1
    %1115 = vsyncpa %s1114, 1

// kernel: transformer_encoder_convlike.2
$region0: #{transformer_encoder_convlike.2}
  #allocation0 [shape = 'u32[]', space=smem, size = 0x4, offset = 0x4, fixed_abs, tag = 'smem constant byte address 0x4 - core index']
  #allocation1 [shape = 'u32[144,128]{1,0:T(1,128)}', space=vmem, size = 0x12000, scoped, tag = 'internal scratch']
  %s0 = inlined_call_operand.hbm [shape: f32[128,16], index: 0, kind: input, shape index: {}]
  %s1 = inlined_call_operand.vmem [shape: f32[1,16], index: 1, kind: input, shape index: {}]
  %s2 = inlined_call_operand.vmem [shape: f32[1,16], index: 2, kind: input, shape index: {}]
  %s3 = inlined_call_operand.vmem [shape: bf16[16,48], index: 3, kind: input, shape index: {}]
  %s4 = inlined_call_operand.vmem [shape: f32[1,48], index: 4, kind: input, shape index: {}]
  %s5 = inlined_call_operand.vmem [shape: bf16[16,16], index: 5, kind: input, shape index: {}]
  %s6 = inlined_call_operand.vmem [shape: f32[1,16], index: 6, kind: input, shape index: {}]
  %s7 = inlined_call_operand.vmem [shape: f32[1,16], index: 7, kind: input, shape index: {}]
  %s8 = inlined_call_operand.vmem [shape: f32[128,16], index: 8, kind: output, shape index: {}]
  %s9 = sld [smem:[#allocation0]]
  $region69: #{transformer_encoder_convlike.2} parent=0
    _
  %s11 = ssub.s32 1, %s9
  %s12 = scalar_select 0, %s11, %s9
  $region1: #{transformer_encoder_convlike.2} parent=0
    #allocation2 [shape = 'u8[65536]{0}', space=vmem, size = 0x10000, scoped, tag = 'input window, operand 0']
    #allocation3 [shape = 's32[2]{0}', space=sflag, size = 0x8, scoped, tag = 'scoped memory for transformer_encoder_convlike.2']
    %13 = vsyncpa [#allocation3], 0
    %s14 = scalar_lea.sflag [#allocation3], 1
    %15 = vsyncpa %s14, 0
    loop: start=0, step=1, limit=4
    $region2: #{transformer_encoder_convlike.2} parent=1 // loop_pre_header
      _
    $region3: #{transformer_encoder_convlike.2} parent=1 // loop_header
      %s17 = sphi 0, %s21
      %p18 = scmp.ge.s32.totalorder %s17, 4
      %s27 = sphi 0, %s29
      %s30 = sphi 0, %s27
      %s31 = sphi 0, %s30
      %s47 = sphi 0, %s31
      %s51 = sphi 0, %s51
      %s53 = sphi 0, %s51
      %s54 = sphi 0, %s53
      %s68 = sphi 0, %s54
      %s72 = sphi 0, %s72
      %s74 = sphi 0, %s72
      %s75 = sphi 0, %s74
      %s89 = sphi 0, %s75
      %s93 = sphi 0, %s93
      %s95 = sphi 0, %s93
      %s96 = sphi 0, %s95
      %s110 = sphi 0, %s96
      %s114 = sphi 0, %s114
      %s116 = sphi 0, %s114
      %s117 = sphi 0, %s116
      %s131 = sphi 0, %s117
      %s135 = sphi 0, %s135
      %s137 = sphi 0, %s135
      %s138 = sphi 0, %s137
      %s152 = sphi 0, %s138
      %s156 = sphi 0, %s156
      %s158 = sphi 0, %s156
      %s159 = sphi 0, %s158
      %s173 = sphi 0, %s159
      %s177 = sphi 0, %s177
      %s179 = sphi 0, %s177
      %s180 = sphi 0, %s179
      %s194 = sphi 0, %s180
      %s200 = sphi 0, %s202
      %s203 = sphi 0, %s200
      %s204 = sphi 0, %s203
      %s220 = sphi 0, %s204
    $region4: #{transformer_encoder_convlike.2} parent=1 // loop_header_branch
      %20 = sbr.rel (%p18) target = $region8
    $region5: #{transformer_encoder_convlike.2} parent=1 // loop_body
      %s22 = ssub.s32 %s17, 1
      %s23 = ssub.s32 %s17, 2
      %s24 = sadd.s32 %s17, 1
      %s25 = ssub.s32 %s17, %s24
      %p26 = scmp.eq.s32.totalorder %s25, 0
      %s28 = sadd.s32 %s27, 1
      %s29 = scalar_select %p26, %s27, %s28
      %p32 = pneg %p26
      %p33 = scmp.eq.s32.totalorder %s17, 1
      %p34 = por %p32, %p33
      %p35 = scmp.ne.s32.totalorder %s27, %s30
      %p36 = scmp.eq.s32.totalorder %s17, 0
      %p37 = por %p35, %p36
      %p38 = scmp.ne.s32.totalorder %s27, %s30
      %p39 = scmp.eq.s32.totalorder %s22, 1
      %p40 = por %p38, %p39
      %p41 = scmp.ne.s32.totalorder %s30, %s31
      %p42 = scmp.eq.s32.totalorder %s22, 0
      %p43 = por %p41, %p42
      %p44 = scmp.ne.s32.totalorder %s30, %s31
      %p45 = scmp.eq.s32.totalorder %s23, 1
      %p46 = por %p44, %p45
      %p48 = scmp.ne.s32.totalorder %s31, %s47
      %p49 = scmp.eq.s32.totalorder %s23, 0
      %p50 = por %p48, %p49
      %s52 = sadd.s32 %s51, 1
      %p55 = scmp.eq.s32.totalorder %s17, 1
      %p56 = scmp.ne.s32.totalorder %s51, %s53
      %p57 = scmp.eq.s32.totalorder %s17, 0
      %p58 = por %p56, %p57
      %p59 = scmp.ne.s32.totalorder %s51, %s53
      %p60 = scmp.eq.s32.totalorder %s22, 1
      %p61 = por %p59, %p60
      %p62 = scmp.ne.s32.totalorder %s53, %s54
      %p63 = scmp.eq.s32.totalorder %s22, 0
      %p64 = por %p62, %p63
      %p65 = scmp.ne.s32.totalorder %s53, %s54
      %p66 = scmp.eq.s32.totalorder %s23, 1
      %p67 = por %p65, %p66
      %p69 = scmp.ne.s32.totalorder %s54, %s68
      %p70 = scmp.eq.s32.totalorder %s23, 0
      %p71 = por %p69, %p70
      %s73 = sadd.s32 %s72, 1
      %p76 = scmp.eq.s32.totalorder %s17, 1
      %p77 = scmp.ne.s32.totalorder %s72, %s74
      %p78 = scmp.eq.s32.totalorder %s17, 0
      %p79 = por %p77, %p78
      %p80 = scmp.ne.s32.totalorder %s72, %s74
      %p81 = scmp.eq.s32.totalorder %s22, 1
      %p82 = por %p80, %p81
      %p83 = scmp.ne.s32.totalorder %s74, %s75
      %p84 = scmp.eq.s32.totalorder %s22, 0
      %p85 = por %p83, %p84
      %p86 = scmp.ne.s32.totalorder %s74, %s75
      %p87 = scmp.eq.s32.totalorder %s23, 1
      %p88 = por %p86, %p87
      %p90 = scmp.ne.s32.totalorder %s75, %s89
      %p91 = scmp.eq.s32.totalorder %s23, 0
      %p92 = por %p90, %p91
      %s94 = sadd.s32 %s93, 1
      %p97 = scmp.eq.s32.totalorder %s17, 1
      %p98 = scmp.ne.s32.totalorder %s93, %s95
      %p99 = scmp.eq.s32.totalorder %s17, 0
      %p100 = por %p98, %p99
      %p101 = scmp.ne.s32.totalorder %s93, %s95
      %p102 = scmp.eq.s32.totalorder %s22, 1
      %p103 = por %p101, %p102
      %p104 = scmp.ne.s32.totalorder %s95, %s96
      %p105 = scmp.eq.s32.totalorder %s22, 0
      %p106 = por %p104, %p105
      %p107 = scmp.ne.s32.totalorder %s95, %s96
      %p108 = scmp.eq.s32.totalorder %s23, 1
      %p109 = por %p107, %p108
      %p111 = scmp.ne.s32.totalorder %s96, %s110
      %p112 = scmp.eq.s32.totalorder %s23, 0
      %p113 = por %p111, %p112
      %s115 = sadd.s32 %s114, 1
      %p118 = scmp.eq.s32.totalorder %s17, 1
      %p119 = scmp.ne.s32.totalorder %s114, %s116
      %p120 = scmp.eq.s32.totalorder %s17, 0
      %p121 = por %p119, %p120
      %p122 = scmp.ne.s32.totalorder %s114, %s116
      %p123 = scmp.eq.s32.totalorder %s22, 1
      %p124 = por %p122, %p123
      %p125 = scmp.ne.s32.totalorder %s116, %s117
      %p126 = scmp.eq.s32.totalorder %s22, 0
      %p127 = por %p125, %p126
      %p128 = scmp.ne.s32.totalorder %s116, %s117
      %p129 = scmp.eq.s32.totalorder %s23, 1
      %p130 = por %p128, %p129
      %p132 = scmp.ne.s32.totalorder %s117, %s131
      %p133 = scmp.eq.s32.totalorder %s23, 0
      %p134 = por %p132, %p133
      %s136 = sadd.s32 %s135, 1
      %p139 = scmp.eq.s32.totalorder %s17, 1
      %p140 = scmp.ne.s32.totalorder %s135, %s137
      %p141 = scmp.eq.s32.totalorder %s17, 0
      %p142 = por %p140, %p141
      %p143 = scmp.ne.s32.totalorder %s135, %s137
      %p144 = scmp.eq.s32.totalorder %s22, 1
      %p145 = por %p143, %p144
      %p146 = scmp.ne.s32.totalorder %s137, %s138
      %p147 = scmp.eq.s32.totalorder %s22, 0
      %p148 = por %p146, %p147
      %p149 = scmp.ne.s32.totalorder %s137, %s138
      %p150 = scmp.eq.s32.totalorder %s23, 1
      %p151 = por %p149, %p150
      %p153 = scmp.ne.s32.totalorder %s138, %s152
      %p154 = scmp.eq.s32.totalorder %s23, 0
      %p155 = por %p153, %p154
      %s157 = sadd.s32 %s156, 1
      %p160 = scmp.eq.s32.totalorder %s17, 1
      %p161 = scmp.ne.s32.totalorder %s156, %s158
      %p162 = scmp.eq.s32.totalorder %s17, 0
      %p163 = por %p161, %p162
      %p164 = scmp.ne.s32.totalorder %s156, %s158
      %p165 = scmp.eq.s32.totalorder %s22, 1
      %p166 = por %p164, %p165
      %p167 = scmp.ne.s32.totalorder %s158, %s159
      %p168 = scmp.eq.s32.totalorder %s22, 0
      %p169 = por %p167, %p168
      %p170 = scmp.ne.s32.totalorder %s158, %s159
      %p171 = scmp.eq.s32.totalorder %s23, 1
      %p172 = por %p170, %p171
      %p174 = scmp.ne.s32.totalorder %s159, %s173
      %p175 = scmp.eq.s32.totalorder %s23, 0
      %p176 = por %p174, %p175
      %s178 = sadd.s32 %s177, 1
      %p181 = scmp.eq.s32.totalorder %s17, 1
      %p182 = scmp.ne.s32.totalorder %s177, %s179
      %p183 = scmp.eq.s32.totalorder %s17, 0
      %p184 = por %p182, %p183
      %p185 = scmp.ne.s32.totalorder %s177, %s179
      %p186 = scmp.eq.s32.totalorder %s22, 1
      %p187 = por %p185, %p186
      %p188 = scmp.ne.s32.totalorder %s179, %s180
      %p189 = scmp.eq.s32.totalorder %s22, 0
      %p190 = por %p188, %p189
      %p191 = scmp.ne.s32.totalorder %s179, %s180
      %p192 = scmp.eq.s32.totalorder %s23, 1
      %p193 = por %p191, %p192
      %p195 = scmp.ne.s32.totalorder %s180, %s194
      %p196 = scmp.eq.s32.totalorder %s23, 0
      %p197 = por %p195, %p196
      %s198 = ssub.s32 %s17, %s24
      %p199 = scmp.eq.s32.totalorder %s198, 0
      %s201 = sadd.s32 %s200, 1
      %s202 = scalar_select %p199, %s200, %s201
      %p205 = pneg %p199
      %p206 = scmp.eq.s32.totalorder %s17, 1
      %p207 = por %p205, %p206
      %p208 = scmp.ne.s32.totalorder %s200, %s203
      %p209 = scmp.eq.s32.totalorder %s17, 0
      %p210 = por %p208, %p209
      %p211 = scmp.ne.s32.totalorder %s200, %s203
      %p212 = scmp.eq.s32.totalorder %s22, 1
      %p213 = por %p211, %p212
      %p214 = scmp.ne.s32.totalorder %s203, %s204
      %p215 = scmp.eq.s32.totalorder %s22, 0
      %p216 = por %p214, %p215
      %p217 = scmp.ne.s32.totalorder %s203, %s204
      %p218 = scmp.eq.s32.totalorder %s23, 1
      %p219 = por %p217, %p218
      %p221 = scmp.ne.s32.totalorder %s204, %s220
      %p222 = scmp.eq.s32.totalorder %s23, 0
      %p223 = por %p221, %p222
      %p224 = scmp.le.s32.totalorder 1, %s17
      %p225 = scmp.lt.s32.totalorder %s17, 3
      %p226 = pnand %p224, %p225
      %p227 = pneg %p226
      // Predicated region
      $region9: #{transformer_encoder_convlike.2} parent=5 // pred_check
        _
      $region10: #{transformer_encoder_convlike.2} parent=5 // pred_check_branch
        %229 = sbr.rel (%p226) target = $region12
      $region11: #{transformer_encoder_convlike.2} parent=5 // pred_region
        %s230 = ssub.s32 %s17, 1
        // Predicated region
        $region13: #{transformer_encoder_convlike.2} parent=11 // pred_check
          %p231 = pneg %p64
        $region14: #{transformer_encoder_convlike.2} parent=11 // pred_check_branch
          %233 = sbr.rel (%p231) target = $region16
        $region15: #{transformer_encoder_convlike.2} parent=11 // pred_region
          _
        $region16: #{transformer_encoder_convlike.2} parent=11 // pred_fallthru
          _
        // Predicated region
        $region17: #{transformer_encoder_convlike.2} parent=11 // pred_check
          %p234 = pneg %p85
        $region18: #{transformer_encoder_convlike.2} parent=11 // pred_check_branch
          %236 = sbr.rel (%p234) target = $region20
        $region19: #{transformer_encoder_convlike.2} parent=11 // pred_region
          _
        $region20: #{transformer_encoder_convlike.2} parent=11 // pred_fallthru
          _
        // Predicated region
        $region21: #{transformer_encoder_convlike.2} parent=11 // pred_check
          %p237 = pneg %p106
        $region22: #{transformer_encoder_convlike.2} parent=11 // pred_check_branch
          %239 = sbr.rel (%p237) target = $region24
        $region23: #{transformer_encoder_convlike.2} parent=11 // pred_region
          _
        $region24: #{transformer_encoder_convlike.2} parent=11 // pred_fallthru
          _
        // Predicated region
        $region25: #{transformer_encoder_convlike.2} parent=11 // pred_check
          %p240 = pneg %p127
        $region26: #{transformer_encoder_convlike.2} parent=11 // pred_check_branch
          %242 = sbr.rel (%p240) target = $region28
        $region27: #{transformer_encoder_convlike.2} parent=11 // pred_region
          _
        $region28: #{transformer_encoder_convlike.2} parent=11 // pred_fallthru
          _
        // Predicated region
        $region29: #{transformer_encoder_convlike.2} parent=11 // pred_check
          %p243 = pneg %p148
        $region30: #{transformer_encoder_convlike.2} parent=11 // pred_check_branch
          %245 = sbr.rel (%p243) target = $region32
        $region31: #{transformer_encoder_convlike.2} parent=11 // pred_region
          _
        $region32: #{transformer_encoder_convlike.2} parent=11 // pred_fallthru
          _
        // Predicated region
        $region33: #{transformer_encoder_convlike.2} parent=11 // pred_check
          %p246 = pneg %p169
        $region34: #{transformer_encoder_convlike.2} parent=11 // pred_check_branch
          %248 = sbr.rel (%p246) target = $region36
        $region35: #{transformer_encoder_convlike.2} parent=11 // pred_region
          _
        $region36: #{transformer_encoder_convlike.2} parent=11 // pred_fallthru
          _
        // Predicated region
        $region37: #{transformer_encoder_convlike.2} parent=11 // pred_check
          %p249 = pneg %p190
        $region38: #{transformer_encoder_convlike.2} parent=11 // pred_check_branch
          %251 = sbr.rel (%p249) target = $region40
        $region39: #{transformer_encoder_convlike.2} parent=11 // pred_region
          _
        $region40: #{transformer_encoder_convlike.2} parent=11 // pred_fallthru
          _
      $region12: #{transformer_encoder_convlike.2} parent=5 // pred_fallthru
        _
      %p252 = scmp.lt.s32.totalorder %s17, 2
      // Predicated region
      $region41: #{transformer_encoder_convlike.2} parent=5 // pred_check
        %p253 = pneg %p252
      $region42: #{transformer_encoder_convlike.2} parent=5 // pred_check_branch
        %255 = sbr.rel (%p253) target = $region44
      $region43: #{transformer_encoder_convlike.2} parent=5 // pred_region
        // Predicated region
        $region45: #{transformer_encoder_convlike.2} parent=43 // pred_check
          %p256 = pneg %p37
        $region46: #{transformer_encoder_convlike.2} parent=43 // pred_check_branch
          %258 = sbr.rel (%p256) target = $region48
        $region47: #{transformer_encoder_convlike.2} parent=43 // pred_region
          %s259 = sand.u32 %s27, 1
          %s260 = scalar_lea.sflag [#allocation3], %s259
          %s261 = sand.u32 %s27, 1
          %s262 = smul.addr %s261, 64
          %s263 = scalar_lea.vmem [#allocation2], %s262
          %s264 = smul.u32 8, %s17
          %s266 = ssub.s32 1024, 1024
          %267 = vsyncadd %s260, %s266
          %s268 = smul.addr %s264, 128
          %s269 = scalar_lea.hbm %s0, %s268
          %s270 = sshll.u32 %s263, 4
          %s271 = int_to_ptr.vmem [resolvable:$true] %s270
          %276 = dma.hbm_to_vmem [thread:$0]  %s269, 1024, %s271, %s260, 128, 128, 8
        $region48: #{transformer_encoder_convlike.2} parent=43 // pred_fallthru
          _
      $region44: #{transformer_encoder_convlike.2} parent=5 // pred_fallthru
        _
      %p277 = scmp.le.s32.totalorder 1, %s17
      %p278 = scmp.lt.s32.totalorder %s17, 3
      %p279 = pnand %p277, %p278
      %p280 = pneg %p279
      // Predicated region
      $region49: #{transformer_encoder_convlike.2} parent=5 // pred_check
        _
      $region50: #{transformer_encoder_convlike.2} parent=5 // pred_check_branch
        %282 = sbr.rel (%p279) target = $region52
      $region51: #{transformer_encoder_convlike.2} parent=5 // pred_region
        %s283 = ssub.s32 %s17, 1
        %s284 = sand.u32 %s30, 1
        %s285 = scalar_lea.sflag [#allocation3], %s284
        %s286 = sand.u32 %s30, 1
        %s287 = smul.addr %s286, 64
        %s288 = scalar_lea.vmem [#allocation2], %s287
        // Predicated region
        $region53: #{transformer_encoder_convlike.2} parent=51 // pred_check
          %p289 = pneg %p43
        $region54: #{transformer_encoder_convlike.2} parent=51 // pred_check_branch
          %291 = sbr.rel (%p289) target = $region56
        $region55: #{transformer_encoder_convlike.2} parent=51 // pred_region
          %292 = dma.done %s285, 1024
        $region56: #{transformer_encoder_convlike.2} parent=51 // pred_fallthru
          _
        %s293 = sand.u32 %s30, 1
        %s294 = scalar_lea.sflag [#allocation3], %s293
        %s295 = sand.u32 %s30, 1
        %s296 = smul.addr %s295, 64
        %s297 = scalar_lea.vmem [#allocation2], %s296
        %p298 = pneg %p43
        %p299 = pneg %p40
        %p300 = pneg %p64
        %p301 = pneg %p61
        %p302 = pneg %p85
        %p303 = pneg %p82
        %p304 = pneg %p106
        %p305 = pneg %p103
        %p306 = pneg %p127
        %p307 = pneg %p124
        %p308 = pneg %p148
        %p309 = pneg %p145
        %p310 = pneg %p169
        %p311 = pneg %p166
        %p312 = pneg %p190
        %p313 = pneg %p187
        %p314 = pneg %p216
        %p315 = pneg %p213
        %s316 = smul.u32 8, %s22
        %p317 = scmp.lt.s32.totalorder %s316, 15
        %s318 = scalar_select %p317, %s316, 15
        %s319 = smul.addr %s318, 8
        %s320 = scalar_lea.vmem %s8, %s319
        %s321 = smul.u32 8, %s22
        %s322 = smul.u32 8, %s22
        %p323 = scmp.lt.s32.totalorder %s322, 15
        %s324 = scalar_select %p323, %s322, 15
        %s325 = smul.addr %s324, 8
        %s326 = scalar_lea.vmem %s8, %s325
        %s327 = smul.u32 8, %s22
        %v329 = vld [vmem:[%s288] sm:$0xff]
        %v330 = vld [vmem:[%s288 + $0x8] sm:$0xff]
        %v331 = vld [vmem:[%s288 + $0x10] sm:$0xff]
        %v332 = vld [vmem:[%s288 + $0x18] sm:$0xff]
        %v333 = vld [vmem:[%s288 + $0x20] sm:$0xff]
        %v334 = vld [vmem:[%s288 + $0x28] sm:$0xff]
        %v335 = vld [vmem:[%s288 + $0x30] sm:$0xff]
        %v336 = vld [vmem:[%s288 + $0x38] sm:$0xff]
        %v337 = vld [vmem:[%s1] sm:$0x1]
        %v339 = vlaneseq
        %v340 = vshrl.u32 %v339, 7
        %v341 = vsub.s32 0, %v340
        %v342 = vrot.slane %v337, %v341
        %v344 = vmul.f32 %v329, %v342
        %v345 = vmul.f32 %v330, %v342
        %v346 = vmul.f32 %v331, %v342
        %v347 = vmul.f32 %v332, %v342
        %v348 = vmul.f32 %v333, %v342
        %v349 = vmul.f32 %v334, %v342
        %v350 = vmul.f32 %v335, %v342
        %v351 = vmul.f32 %v336, %v342
        %v352 = vld [vmem:[%s2] sm:$0x1]
        %v354 = vlaneseq
        %v355 = vshrl.u32 %v354, 7
        %v356 = vsub.s32 0, %v355
        %v357 = vrot.slane %v352, %v356
        %v359 = vadd.f32 %v344, %v357
        %v360 = vadd.f32 %v345, %v357
        %v361 = vadd.f32 %v346, %v357
        %v362 = vadd.f32 %v347, %v357
        %v363 = vadd.f32 %v348, %v357
        %v364 = vadd.f32 %v349, %v357
        %v365 = vadd.f32 %v350, %v357
        %v366 = vadd.f32 %v351, %v357
        %v367 = vpack.c.bf16 %v360, %v359
        %v368 = vpack.c.bf16 %v362, %v361
        %v369 = vpack.c.bf16 %v364, %v363
        %v370 = vpack.c.bf16 %v366, %v365
        %v371 = vld [vmem:[%s3] sm:$0xf]
        %v372 = vld [vmem:[%s3 + $0x4] sm:$0xf]
        %v373 = vld [vmem:[%s4] sm:$0x1]
        %v375 = vlaneseq
        %v376 = vshrl.u32 %v375, 7
        %v377 = vsub.s32 0, %v376
        %v378 = vrot.slane %v373, %v377
        %v382 = vunpack.c.l.b16 %v371
        %v383 = vunpack.c.l.b16 %v372
        %v384 = vpack.c.b16 %v383, %v382
        %vm386 = vcmask 130048
        %v388 = vsel %vm386, %v367, 0
        %v391 = vsel %vm386, %v368, 0
        %v394 = vsel %vm386, %v369, 0
        %v397 = vsel %vm386, %v370, 0
        %399 = vmatprep.subr.bf16.mxu0 0
        %400 = vmatpush1.bf16.msra.mxu0 %v384
        %401 = vmatprep.subr.bf16.mxu0 0
        %402 = vmatpush1.bf16.msra.mxu0 0
        %403 = vmatprep.subr.bf16.mxu0 0
        %404 = vmatpush1.bf16.msra.mxu0 0
        %405 = vmatprep.subr.bf16.mxu0 0
        %406 = vmatpush1.bf16.msra.mxu0 0
        %407 = vmatprep.subr.bf16.mxu0 0
        %408 = vmatpush1.bf16.msra.mxu0 0
        %409 = vmatprep.subr.bf16.mxu0 0
        %410 = vmatpush1.bf16.msra.mxu0 0
        %411 = vmatprep.subr.bf16.mxu0 0
        %412 = vmatpush1.bf16.msra.mxu0 0
        %413 = vmatprep.subr.bf16.mxu0 0
        %414 = vmatpush1.bf16.msra.mxu0 0
        %415 = vmatprep.subr.bf16.mxu0 0
        %416 = vmatpush1.bf16.msra.mxu0 0
        %417 = vmatprep.subr.bf16.mxu0 0
        %418 = vmatpush1.bf16.msra.mxu0 0
        %419 = vmatprep.subr.bf16.mxu0 0
        %420 = vmatpush1.bf16.msra.mxu0 0
        %421 = vmatprep.subr.bf16.mxu0 0
        %422 = vmatpush1.bf16.msra.mxu0 0
        %423 = vmatprep.subr.bf16.mxu0 0
        %424 = vmatpush1.bf16.msra.mxu0 0
        %425 = vmatprep.subr.bf16.mxu0 0
        %426 = vmatpush1.bf16.msra.mxu0 0
        %427 = vmatprep.subr.bf16.mxu0 0
        %428 = vmatpush1.bf16.msra.mxu0 0
        %429 = vmatprep.subr.bf16.mxu0 0
        %430 = vmatpush1.bf16.msra.mxu0 0
        %431 = vmatprep.mubr.bf16.mxu0 0
        %432 = vmatmul.mubr.bf16.gmra.mrb[0].mxu0 %v388
        %v433 = vpop.f32.mrb[0].mxu0
        %v434 = vadd.f32 %v378, %v433
        %v435 = vpop.f32.mrb[0].mxu0
        %v436 = vpop.f32.mrb[0].mxu0
        %v437 = vadd.f32 %v378, %v436
        %v438 = vpop.f32.mrb[0].mxu0
        %439 = vmatprep.mubr.bf16.mxu0 0
        %440 = vmatmul.mubr.bf16.gmra.mrb[0].mxu0 %v391
        %v441 = vpop.f32.mrb[0].mxu0
        %v442 = vadd.f32 %v378, %v441
        %v443 = vpop.f32.mrb[0].mxu0
        %v444 = vpop.f32.mrb[0].mxu0
        %v445 = vadd.f32 %v378, %v444
        %v446 = vpop.f32.mrb[0].mxu0
        %447 = vmatprep.mubr.bf16.mxu0 0
        %448 = vmatmul.mubr.bf16.gmra.mrb[0].mxu0 %v394
        %v449 = vpop.f32.mrb[0].mxu0
        %v450 = vadd.f32 %v378, %v449
        %v451 = vpop.f32.mrb[0].mxu0
        %v452 = vpop.f32.mrb[0].mxu0
        %v453 = vadd.f32 %v378, %v452
        %v454 = vpop.f32.mrb[0].mxu0
        %455 = vmatprep.mubr.bf16.mxu0 0
        %456 = vmatmul.mubr.bf16.gmra.mrb[0].mxu0 %v397
        %v457 = vpop.f32.mrb[0].mxu0
        %v458 = vadd.f32 %v378, %v457
        %v459 = vpop.f32.mrb[0].mxu0
        %v460 = vpop.f32.mrb[0].mxu0
        %v461 = vadd.f32 %v378, %v460
        %v462 = vpop.f32.mrb[0].mxu0
        %463 = vdwg.mxu0
        %v464 = vpack.c.bf16 %v437, %v434
        %v465 = vpack.c.bf16 %v445, %v442
        %v466 = vpack.c.bf16 %v453, %v450
        %v467 = vpack.c.bf16 %v461, %v458
        %472 = vrot.lane.b32.xlu0 %v464, 112
        %v473 = vpop.permute.xlu0 %472
        %474 = vrot.lane.b32.xlu0 %v465, 112
        %v475 = vpop.permute.xlu0 %474
        %476 = vrot.lane.b32.xlu0 %v466, 112
        %v477 = vpop.permute.xlu0 %476
        %478 = vrot.lane.b32.xlu0 %v467, 112
        %v479 = vpop.permute.xlu0 %478
        %vm480 = vcmask 64512
        %v482 = vsel %vm480, %v464, 0
        %v485 = vsel %vm480, %v465, 0
        %v488 = vsel %vm480, %v466, 0
        %v491 = vsel %vm480, %v467, 0
        %v494 = vsel %vm480, %v473, 0
        %v497 = vsel %vm480, %v475, 0
        %v500 = vsel %vm480, %v477, 0
        %v503 = vsel %vm480, %v479, 0
        %505 = vmatprep.subr.bf16.mxu0 0
        %506 = vmatpush1.bf16.xpose.msra.mxu0 %v494
        %507 = vmatprep.subr.bf16.mxu0 0
        %508 = vmatpush1.bf16.xpose.msra.mxu0 %v497
        %509 = vmatprep.subr.bf16.mxu0 0
        %510 = vmatpush1.bf16.xpose.msra.mxu0 %v500
        %511 = vmatprep.subr.bf16.mxu0 0
        %512 = vmatpush1.bf16.xpose.msra.mxu0 %v503
        %513 = vmatprep.subr.bf16.mxu0 0
        %514 = vmatpush1.bf16.xpose.msra.mxu0 0
        %515 = vmatprep.subr.bf16.mxu0 0
        %516 = vmatpush1.bf16.xpose.msra.mxu0 0
        %517 = vmatprep.subr.bf16.mxu0 0
        %518 = vmatpush1.bf16.xpose.msra.mxu0 0
        %519 = vmatprep.subr.bf16.mxu0 0
        %520 = vmatpush1.bf16.xpose.msra.mxu0 0
        %521 = vmatprep.subr.bf16.mxu0 0
        %522 = vmatpush1.bf16.xpose.msra.mxu0 0
        %523 = vmatprep.subr.bf16.mxu0 0
        %524 = vmatpush1.bf16.xpose.msra.mxu0 0
        %525 = vmatprep.subr.bf16.mxu0 0
        %526 = vmatpush1.bf16.xpose.msra.mxu0 0
        %527 = vmatprep.subr.bf16.mxu0 0
        %528 = vmatpush1.bf16.xpose.msra.mxu0 0
        %529 = vmatprep.subr.bf16.mxu0 0
        %530 = vmatpush1.bf16.xpose.msra.mxu0 0
        %531 = vmatprep.subr.bf16.mxu0 0
        %532 = vmatpush1.bf16.xpose.msra.mxu0 0
        %533 = vmatprep.subr.bf16.mxu0 0
        %534 = vmatpush1.bf16.xpose.msra.mxu0 0
        %535 = vmatprep.subr.bf16.mxu0 0
        %536 = vmatpush1.bf16.xpose.msra.mxu0 0
        %537 = vmatprep.mubr.bf16.mxu0 0
        %538 = vmatmul.mubr.bf16.gmra.mrb[0].mxu0 %v482
        %v539 = vpop.f32.mrb[0].mxu0
        %v540 = vadd.f32 0.0, %v539
        %v541 = vpop.f32.mrb[0].mxu0
        %v542 = vpop.f32.mrb[0].mxu0
        %v543 = vadd.f32 0.0, %v542
        %v544 = vpop.f32.mrb[0].mxu0
        %545 = vmatprep.mubr.bf16.mxu0 0
        %546 = vmatmul.mubr.bf16.gmra.mrb[0].mxu0 %v485
        %v547 = vpop.f32.mrb[0].mxu0
        %v548 = vadd.f32 0.0, %v547
        %v549 = vpop.f32.mrb[0].mxu0
        %v550 = vpop.f32.mrb[0].mxu0
        %v551 = vadd.f32 0.0, %v550
        %v552 = vpop.f32.mrb[0].mxu0
        %553 = vmatprep.mubr.bf16.mxu0 0
        %554 = vmatmul.mubr.bf16.gmra.mrb[0].mxu0 %v488
        %v555 = vpop.f32.mrb[0].mxu0
        %v556 = vadd.f32 0.0, %v555
        %v557 = vpop.f32.mrb[0].mxu0
        %v558 = vpop.f32.mrb[0].mxu0
        %v559 = vadd.f32 0.0, %v558
        %v560 = vpop.f32.mrb[0].mxu0
        %561 = vmatprep.mubr.bf16.mxu0 0
        %562 = vmatmul.mubr.bf16.gmra.mrb[0].mxu0 %v491
        %v563 = vpop.f32.mrb[0].mxu0
        %v564 = vadd.f32 0.0, %v563
        %v565 = vpop.f32.mrb[0].mxu0
        %v566 = vpop.f32.mrb[0].mxu0
        %v567 = vadd.f32 0.0, %v566
        %v568 = vpop.f32.mrb[0].mxu0
        %569 = vdwg.mxu0
        %v570 = vmul.f32 %v540, 0.35355338
        %v571 = vmul.f32 %v543, 0.35355338
        %v572 = vmul.f32 %v548, 0.35355338
        %v573 = vmul.f32 %v551, 0.35355338
        %v574 = vmul.f32 %v556, 0.35355338
        %v575 = vmul.f32 %v559, 0.35355338
        %v576 = vmul.f32 %v564, 0.35355338
        %v577 = vmul.f32 %v567, 0.35355338
        %vm578 = vcmask 523264
        %v579 = vsel %vm578, %v570, -inf
        %580 = vmax.xlane.f32.xlu0 %v579
        %v581 = vpop.xlane.xlu0 %580
        %v582 = vsel %vm578, %v571, -inf
        %583 = vmax.xlane.f32.xlu0 %v582
        %v584 = vpop.xlane.xlu0 %583
        %v585 = vsel %vm578, %v572, -inf
        %586 = vmax.xlane.f32.xlu0 %v585
        %v587 = vpop.xlane.xlu0 %586
        %v588 = vsel %vm578, %v573, -inf
        %589 = vmax.xlane.f32.xlu0 %v588
        %v590 = vpop.xlane.xlu0 %589
        %v591 = vsel %vm578, %v574, -inf
        %592 = vmax.xlane.f32.xlu0 %v591
        %v593 = vpop.xlane.xlu0 %592
        %v594 = vsel %vm578, %v575, -inf
        %595 = vmax.xlane.f32.xlu0 %v594
        %v596 = vpop.xlane.xlu0 %595
        %v597 = vsel %vm578, %v576, -inf
        %598 = vmax.xlane.f32.xlu0 %v597
        %v599 = vpop.xlane.xlu0 %598
        %v600 = vsel %vm578, %v577, -inf
        %601 = vmax.xlane.f32.xlu0 %v600
        %v602 = vpop.xlane.xlu0 %601
        %v603 = vsub.f32 %v570, %v581
        %v604 = vsub.f32 %v571, %v584
        %v605 = vsub.f32 %v572, %v587
        %v606 = vsub.f32 %v573, %v590
        %v607 = vsub.f32 %v574, %v593
        %v608 = vsub.f32 %v575, %v596
        %v609 = vsub.f32 %v576, %v599
        %v610 = vsub.f32 %v577, %v602
        %v611 = vmul.f32 %v603, 1.442695
        %v612 = vpow.pop %v611
        %v613 = vmul.f32 %v604, 1.442695
        %v614 = vpow.pop %v613
        %v615 = vmul.f32 %v605, 1.442695
        %v616 = vpow.pop %v615
        %v617 = vmul.f32 %v606, 1.442695
        %v618 = vpow.pop %v617
        %v619 = vmul.f32 %v607, 1.442695
        %v620 = vpow.pop %v619
        %v621 = vmul.f32 %v608, 1.442695
        %v622 = vpow.pop %v621
        %v623 = vmul.f32 %v609, 1.442695
        %v624 = vpow.pop %v623
        %v625 = vmul.f32 %v610, 1.442695
        %v626 = vpow.pop %v625
        %v627 = vsel %vm578, %v612, 0.0
        %628 = vadd.xlane.f32.xlu0 %v627
        %v629 = vpop.xlane.xlu0 %628
        %v630 = vsel %vm578, %v614, 0.0
        %631 = vadd.xlane.f32.xlu0 %v630
        %v632 = vpop.xlane.xlu0 %631
        %v633 = vsel %vm578, %v616, 0.0
        %634 = vadd.xlane.f32.xlu0 %v633
        %v635 = vpop.xlane.xlu0 %634
        %v636 = vsel %vm578, %v618, 0.0
        %637 = vadd.xlane.f32.xlu0 %v636
        %v638 = vpop.xlane.xlu0 %637
        %v639 = vsel %vm578, %v620, 0.0
        %640 = vadd.xlane.f32.xlu0 %v639
        %v641 = vpop.xlane.xlu0 %640
        %v642 = vsel %vm578, %v622, 0.0
        %643 = vadd.xlane.f32.xlu0 %v642
        %v644 = vpop.xlane.xlu0 %643
        %v645 = vsel %vm578, %v624, 0.0
        %646 = vadd.xlane.f32.xlu0 %v645
        %v647 = vpop.xlane.xlu0 %646
        %v648 = vsel %vm578, %v626, 0.0
        %649 = vadd.xlane.f32.xlu0 %v648
        %v650 = vpop.xlane.xlu0 %649
        %v651 = vpack.c.bf16 %v614, %v612
        %v652 = vpack.c.bf16 %v618, %v616
        %v653 = vpack.c.bf16 %v622, %v620
        %v654 = vpack.c.bf16 %v626, %v624
        %655 = vrot.lane.b32.xlu0 %v464, 96
        %v656 = vpop.permute.xlu0 %655
        %657 = vrot.lane.b32.xlu0 %v465, 96
        %v658 = vpop.permute.xlu0 %657
        %659 = vrot.lane.b32.xlu0 %v466, 96
        %v660 = vpop.permute.xlu0 %659
        %661 = vrot.lane.b32.xlu0 %v467, 96
        %v662 = vpop.permute.xlu0 %661
        %v668 = vsel %vm578, %v651, 0
        %v671 = vsel %vm578, %v652, 0
        %v674 = vsel %vm578, %v653, 0
        %v677 = vsel %vm578, %v654, 0
        %679 = vmatprep.subr.bf16.mxu0 0
        %680 = vmatpush1.bf16.msra.mxu0 %v656
        %681 = vmatprep.subr.bf16.mxu0 0
        %682 = vmatpush1.bf16.msra.mxu0 %v658
        %683 = vmatprep.subr.bf16.mxu0 0
        %684 = vmatpush1.bf16.msra.mxu0 %v660
        %685 = vmatprep.subr.bf16.mxu0 0
        %686 = vmatpush1.bf16.msra.mxu0 %v662
        %687 = vmatprep.subr.bf16.mxu0 0
        %688 = vmatpush1.bf16.msra.mxu0 0
        %689 = vmatprep.subr.bf16.mxu0 0
        %690 = vmatpush1.bf16.msra.mxu0 0
        %691 = vmatprep.subr.bf16.mxu0 0
        %692 = vmatpush1.bf16.msra.mxu0 0
        %693 = vmatprep.subr.bf16.mxu0 0
        %694 = vmatpush1.bf16.msra.mxu0 0
        %695 = vmatprep.subr.bf16.mxu0 0
        %696 = vmatpush1.bf16.msra.mxu0 0
        %697 = vmatprep.subr.bf16.mxu0 0
        %698 = vmatpush1.bf16.msra.mxu0 0
        %699 = vmatprep.subr.bf16.mxu0 0
        %700 = vmatpush1.bf16.msra.mxu0 0
        %701 = vmatprep.subr.bf16.mxu0 0
        %702 = vmatpush1.bf16.msra.mxu0 0
        %703 = vmatprep.subr.bf16.mxu0 0
        %704 = vmatpush1.bf16.msra.mxu0 0
        %705 = vmatprep.subr.bf16.mxu0 0
        %706 = vmatpush1.bf16.msra.mxu0 0
        %707 = vmatprep.subr.bf16.mxu0 0
        %708 = vmatpush1.bf16.msra.mxu0 0
        %709 = vmatprep.subr.bf16.mxu0 0
        %710 = vmatpush1.bf16.msra.mxu0 0
        %711 = vmatprep.mubr.bf16.mxu0 0
        %712 = vmatmul.mubr.bf16.gmra.mrb[0].mxu0 %v668
        %v713 = vpop.f32.mrb[0].mxu0
        %v714 = vadd.f32 0.0, %v713
        %v715 = vpop.f32.mrb[0].mxu0
        %v716 = vpop.f32.mrb[0].mxu0
        %v717 = vadd.f32 0.0, %v716
        %v718 = vpop.f32.mrb[0].mxu0
        %719 = vmatprep.mubr.bf16.mxu0 0
        %720 = vmatmul.mubr.bf16.gmra.mrb[0].mxu0 %v671
        %v721 = vpop.f32.mrb[0].mxu0
        %v722 = vadd.f32 0.0, %v721
        %v723 = vpop.f32.mrb[0].mxu0
        %v724 = vpop.f32.mrb[0].mxu0
        %v725 = vadd.f32 0.0, %v724
        %v726 = vpop.f32.mrb[0].mxu0
        %727 = vmatprep.mubr.bf16.mxu0 0
        %728 = vmatmul.mubr.bf16.gmra.mrb[0].mxu0 %v674
        %v729 = vpop.f32.mrb[0].mxu0
        %v730 = vadd.f32 0.0, %v729
        %v731 = vpop.f32.mrb[0].mxu0
        %v732 = vpop.f32.mrb[0].mxu0
        %v733 = vadd.f32 0.0, %v732
        %v734 = vpop.f32.mrb[0].mxu0
        %735 = vmatprep.mubr.bf16.mxu0 0
        %736 = vmatmul.mubr.bf16.gmra.mrb[0].mxu0 %v677
        %v737 = vpop.f32.mrb[0].mxu0
        %v738 = vadd.f32 0.0, %v737
        %v739 = vpop.f32.mrb[0].mxu0
        %v740 = vpop.f32.mrb[0].mxu0
        %v741 = vadd.f32 0.0, %v740
        %v742 = vpop.f32.mrb[0].mxu0
        %743 = vdwg.mxu0
        %v744 = vrcp.pop %v629
        %v745 = vrcp.pop %v632
        %v746 = vrcp.pop %v635
        %v747 = vrcp.pop %v638
        %v748 = vrcp.pop %v641
        %v749 = vrcp.pop %v644
        %v750 = vrcp.pop %v647
        %v751 = vrcp.pop %v650
        %v752 = vmul.f32 %v714, %v744
        %v753 = vmul.f32 %v717, %v745
        %v754 = vmul.f32 %v722, %v746
        %v755 = vmul.f32 %v725, %v747
        %v756 = vmul.f32 %v730, %v748
        %v757 = vmul.f32 %v733, %v749
        %v758 = vmul.f32 %v738, %v750
        %v759 = vmul.f32 %v741, %v751
        %760 = vrot.lane.b32.xlu0 %v464, 120
        %v761 = vpop.permute.xlu0 %760
        %762 = vrot.lane.b32.xlu0 %v465, 120
        %v763 = vpop.permute.xlu0 %762
        %764 = vrot.lane.b32.xlu0 %v466, 120
        %v765 = vpop.permute.xlu0 %764
        %766 = vrot.lane.b32.xlu0 %v467, 120
        %v767 = vpop.permute.xlu0 %766
        %768 = vrot.lane.b32.xlu0 %v464, 104
        %v769 = vpop.permute.xlu0 %768
        %770 = vrot.lane.b32.xlu0 %v465, 104
        %v771 = vpop.permute.xlu0 %770
        %772 = vrot.lane.b32.xlu0 %v466, 104
        %v773 = vpop.permute.xlu0 %772
        %774 = vrot.lane.b32.xlu0 %v467, 104
        %v775 = vpop.permute.xlu0 %774
        %v777 = vsel %vm480, %v761, 0
        %v780 = vsel %vm480, %v763, 0
        %v783 = vsel %vm480, %v765, 0
        %v786 = vsel %vm480, %v767, 0
        %v789 = vsel %vm480, %v769, 0
        %v792 = vsel %vm480, %v771, 0
        %v795 = vsel %vm480, %v773, 0
        %v798 = vsel %vm480, %v775, 0
        %800 = vmatprep.subr.bf16.mxu0 0
        %801 = vmatpush1.bf16.xpose.msra.mxu0 %v789
        %802 = vmatprep.subr.bf16.mxu0 0
        %803 = vmatpush1.bf16.xpose.msra.mxu0 %v792
        %804 = vmatprep.subr.bf16.mxu0 0
        %805 = vmatpush1.bf16.xpose.msra.mxu0 %v795
        %806 = vmatprep.subr.bf16.mxu0 0
        %807 = vmatpush1.bf16.xpose.msra.mxu0 %v798
        %808 = vmatprep.subr.bf16.mxu0 0
        %809 = vmatpush1.bf16.xpose.msra.mxu0 0
        %810 = vmatprep.subr.bf16.mxu0 0
        %811 = vmatpush1.bf16.xpose.msra.mxu0 0
        %812 = vmatprep.subr.bf16.mxu0 0
        %813 = vmatpush1.bf16.xpose.msra.mxu0 0
        %814 = vmatprep.subr.bf16.mxu0 0
        %815 = vmatpush1.bf16.xpose.msra.mxu0 0
        %816 = vmatprep.subr.bf16.mxu0 0
        %817 = vmatpush1.bf16.xpose.msra.mxu0 0
        %818 = vmatprep.subr.bf16.mxu0 0
        %819 = vmatpush1.bf16.xpose.msra.mxu0 0
        %820 = vmatprep.subr.bf16.mxu0 0
        %821 = vmatpush1.bf16.xpose.msra.mxu0 0
        %822 = vmatprep.subr.bf16.mxu0 0
        %823 = vmatpush1.bf16.xpose.msra.mxu0 0
        %824 = vmatprep.subr.bf16.mxu0 0
        %825 = vmatpush1.bf16.xpose.msra.mxu0 0
        %826 = vmatprep.subr.bf16.mxu0 0
        %827 = vmatpush1.bf16.xpose.msra.mxu0 0
        %828 = vmatprep.subr.bf16.mxu0 0
        %829 = vmatpush1.bf16.xpose.msra.mxu0 0
        %830 = vmatprep.subr.bf16.mxu0 0
        %831 = vmatpush1.bf16.xpose.msra.mxu0 0
        %832 = vmatprep.mubr.bf16.mxu0 0
        %833 = vmatmul.mubr.bf16.gmra.mrb[0].mxu0 %v777
        %v834 = vpop.f32.mrb[0].mxu0
        %v835 = vadd.f32 0.0, %v834
        %v836 = vpop.f32.mrb[0].mxu0
        %v837 = vpop.f32.mrb[0].mxu0
        %v838 = vadd.f32 0.0, %v837
        %v839 = vpop.f32.mrb[0].mxu0
        %840 = vmatprep.mubr.bf16.mxu0 0
        %841 = vmatmul.mubr.bf16.gmra.mrb[0].mxu0 %v780
        %v842 = vpop.f32.mrb[0].mxu0
        %v843 = vadd.f32 0.0, %v842
        %v844 = vpop.f32.mrb[0].mxu0
        %v845 = vpop.f32.mrb[0].mxu0
        %v846 = vadd.f32 0.0, %v845
        %v847 = vpop.f32.mrb[0].mxu0
        %848 = vmatprep.mubr.bf16.mxu0 0
        %849 = vmatmul.mubr.bf16.gmra.mrb[0].mxu0 %v783
        %v850 = vpop.f32.mrb[0].mxu0
        %v851 = vadd.f32 0.0, %v850
        %v852 = vpop.f32.mrb[0].mxu0
        %v853 = vpop.f32.mrb[0].mxu0
        %v854 = vadd.f32 0.0, %v853
        %v855 = vpop.f32.mrb[0].mxu0
        %856 = vmatprep.mubr.bf16.mxu0 0
        %857 = vmatmul.mubr.bf16.gmra.mrb[0].mxu0 %v786
        %v858 = vpop.f32.mrb[0].mxu0
        %v859 = vadd.f32 0.0, %v858
        %v860 = vpop.f32.mrb[0].mxu0
        %v861 = vpop.f32.mrb[0].mxu0
        %v862 = vadd.f32 0.0, %v861
        %v863 = vpop.f32.mrb[0].mxu0
        %864 = vdwg.mxu0
        %v865 = vmul.f32 %v835, 0.35355338
        %v866 = vmul.f32 %v838, 0.35355338
        %v867 = vmul.f32 %v843, 0.35355338
        %v868 = vmul.f32 %v846, 0.35355338
        %v869 = vmul.f32 %v851, 0.35355338
        %v870 = vmul.f32 %v854, 0.35355338
        %v871 = vmul.f32 %v859, 0.35355338
        %v872 = vmul.f32 %v862, 0.35355338
        %v873 = vsel %vm578, %v865, -inf
        %874 = vmax.xlane.f32.xlu0 %v873
        %v875 = vpop.xlane.xlu0 %874
        %v876 = vsel %vm578, %v866, -inf
        %877 = vmax.xlane.f32.xlu0 %v876
        %v878 = vpop.xlane.xlu0 %877
        %v879 = vsel %vm578, %v867, -inf
        %880 = vmax.xlane.f32.xlu0 %v879
        %v881 = vpop.xlane.xlu0 %880
        %v882 = vsel %vm578, %v868, -inf
        %883 = vmax.xlane.f32.xlu0 %v882
        %v884 = vpop.xlane.xlu0 %883
        %v885 = vsel %vm578, %v869, -inf
        %886 = vmax.xlane.f32.xlu0 %v885
        %v887 = vpop.xlane.xlu0 %886
        %v888 = vsel %vm578, %v870, -inf
        %889 = vmax.xlane.f32.xlu0 %v888
        %v890 = vpop.xlane.xlu0 %889
        %v891 = vsel %vm578, %v871, -inf
        %892 = vmax.xlane.f32.xlu0 %v891
        %v893 = vpop.xlane.xlu0 %892
        %v894 = vsel %vm578, %v872, -inf
        %895 = vmax.xlane.f32.xlu0 %v894
        %v896 = vpop.xlane.xlu0 %895
        %v897 = vsub.f32 %v865, %v875
        %v898 = vsub.f32 %v866, %v878
        %v899 = vsub.f32 %v867, %v881
        %v900 = vsub.f32 %v868, %v884
        %v901 = vsub.f32 %v869, %v887
        %v902 = vsub.f32 %v870, %v890
        %v903 = vsub.f32 %v871, %v893
        %v904 = vsub.f32 %v872, %v896
        %v905 = vmul.f32 %v897, 1.442695
        %v906 = vpow.pop %v905
        %v907 = vmul.f32 %v898, 1.442695
        %v908 = vpow.pop %v907
        %v909 = vmul.f32 %v899, 1.442695
        %v910 = vpow.pop %v909
        %v911 = vmul.f32 %v900, 1.442695
        %v912 = vpow.pop %v911
        %v913 = vmul.f32 %v901, 1.442695
        %v914 = vpow.pop %v913
        %v915 = vmul.f32 %v902, 1.442695
        %v916 = vpow.pop %v915
        %v917 = vmul.f32 %v903, 1.442695
        %v918 = vpow.pop %v917
        %v919 = vmul.f32 %v904, 1.442695
        %v920 = vpow.pop %v919
        %v921 = vsel %vm578, %v906, 0.0
        %922 = vadd.xlane.f32.xlu0 %v921
        %v923 = vpop.xlane.xlu0 %922
        %v924 = vsel %vm578, %v908, 0.0
        %925 = vadd.xlane.f32.xlu0 %v924
        %v926 = vpop.xlane.xlu0 %925
        %v927 = vsel %vm578, %v910, 0.0
        %928 = vadd.xlane.f32.xlu0 %v927
        %v929 = vpop.xlane.xlu0 %928
        %v930 = vsel %vm578, %v912, 0.0
        %931 = vadd.xlane.f32.xlu0 %v930
        %v932 = vpop.xlane.xlu0 %931
        %v933 = vsel %vm578, %v914, 0.0
        %934 = vadd.xlane.f32.xlu0 %v933
        %v935 = vpop.xlane.xlu0 %934
        %v936 = vsel %vm578, %v916, 0.0
        %937 = vadd.xlane.f32.xlu0 %v936
        %v938 = vpop.xlane.xlu0 %937
        %v939 = vsel %vm578, %v918, 0.0
        %940 = vadd.xlane.f32.xlu0 %v939
        %v941 = vpop.xlane.xlu0 %940
        %v942 = vsel %vm578, %v920, 0.0
        %943 = vadd.xlane.f32.xlu0 %v942
        %v944 = vpop.xlane.xlu0 %943
        %v945 = vpack.c.bf16 %v908, %v906
        %v946 = vpack.c.bf16 %v912, %v910
        %v947 = vpack.c.bf16 %v916, %v914
        %v948 = vpack.c.bf16 %v920, %v918
        %949 = vrot.lane.b32.xlu0 %v464, 88
        %v950 = vpop.permute.xlu0 %949
        %951 = vrot.lane.b32.xlu0 %v465, 88
        %v952 = vpop.permute.xlu0 %951
        %953 = vrot.lane.b32.xlu0 %v466, 88
        %v954 = vpop.permute.xlu0 %953
        %955 = vrot.lane.b32.xlu0 %v467, 88
        %v956 = vpop.permute.xlu0 %955
        %v962 = vsel %vm578, %v945, 0
        %v965 = vsel %vm578, %v946, 0
        %v968 = vsel %vm578, %v947, 0
        %v971 = vsel %vm578, %v948, 0
        %973 = vmatprep.subr.bf16.mxu0 0
        %974 = vmatpush1.bf16.msra.mxu0 %v950
        %975 = vmatprep.subr.bf16.mxu0 0
        %976 = vmatpush1.bf16.msra.mxu0 %v952
        %977 = vmatprep.subr.bf16.mxu0 0
        %978 = vmatpush1.bf16.msra.mxu0 %v954
        %979 = vmatprep.subr.bf16.mxu0 0
        %980 = vmatpush1.bf16.msra.mxu0 %v956
        %981 = vmatprep.subr.bf16.mxu0 0
        %982 = vmatpush1.bf16.msra.mxu0 0
        %983 = vmatprep.subr.bf16.mxu0 0
        %984 = vmatpush1.bf16.msra.mxu0 0
        %985 = vmatprep.subr.bf16.mxu0 0
        %986 = vmatpush1.bf16.msra.mxu0 0
        %987 = vmatprep.subr.bf16.mxu0 0
        %988 = vmatpush1.bf16.msra.mxu0 0
        %989 = vmatprep.subr.bf16.mxu0 0
        %990 = vmatpush1.bf16.msra.mxu0 0
        %991 = vmatprep.subr.bf16.mxu0 0
        %992 = vmatpush1.bf16.msra.mxu0 0
        %993 = vmatprep.subr.bf16.mxu0 0
        %994 = vmatpush1.bf16.msra.mxu0 0
        %995 = vmatprep.subr.bf16.mxu0 0
        %996 = vmatpush1.bf16.msra.mxu0 0
        %997 = vmatprep.subr.bf16.mxu0 0
        %998 = vmatpush1.bf16.msra.mxu0 0
        %999 = vmatprep.subr.bf16.mxu0 0
        %1000 = vmatpush1.bf16.msra.mxu0 0
        %1001 = vmatprep.subr.bf16.mxu0 0
        %1002 = vmatpush1.bf16.msra.mxu0 0
        %1003 = vmatprep.subr.bf16.mxu0 0
        %1004 = vmatpush1.bf16.msra.mxu0 0
        %1005 = vmatprep.mubr.bf16.mxu0 0
        %1006 = vmatmul.mubr.bf16.gmra.mrb[0].mxu0 %v962
        %v1007 = vpop.f32.mrb[0].mxu0
        %v1008 = vadd.f32 0.0, %v1007
        %v1009 = vpop.f32.mrb[0].mxu0
        %v1010 = vpop.f32.mrb[0].mxu0
        %v1011 = vadd.f32 0.0, %v1010
        %v1012 = vpop.f32.mrb[0].mxu0
        %1013 = vmatprep.mubr.bf16.mxu0 0
        %1014 = vmatmul.mubr.bf16.gmra.mrb[0].mxu0 %v965
        %v1015 = vpop.f32.mrb[0].mxu0
        %v1016 = vadd.f32 0.0, %v1015
        %v1017 = vpop.f32.mrb[0].mxu0
        %v1018 = vpop.f32.mrb[0].mxu0
        %v1019 = vadd.f32 0.0, %v1018
        %v1020 = vpop.f32.mrb[0].mxu0
        %1021 = vmatprep.mubr.bf16.mxu0 0
        %1022 = vmatmul.mubr.bf16.gmra.mrb[0].mxu0 %v968
        %v1023 = vpop.f32.mrb[0].mxu0
        %v1024 = vadd.f32 0.0, %v1023
        %v1025 = vpop.f32.mrb[0].mxu0
        %v1026 = vpop.f32.mrb[0].mxu0
        %v1027 = vadd.f32 0.0, %v1026
        %v1028 = vpop.f32.mrb[0].mxu0
        %1029 = vmatprep.mubr.bf16.mxu0 0
        %1030 = vmatmul.mubr.bf16.gmra.mrb[0].mxu0 %v971
        %v1031 = vpop.f32.mrb[0].mxu0
        %v1032 = vadd.f32 0.0, %v1031
        %v1033 = vpop.f32.mrb[0].mxu0
        %v1034 = vpop.f32.mrb[0].mxu0
        %v1035 = vadd.f32 0.0, %v1034
        %v1036 = vpop.f32.mrb[0].mxu0
        %1037 = vdwg.mxu0
        %v1038 = vrcp.pop %v923
        %v1039 = vrcp.pop %v926
        %v1040 = vrcp.pop %v929
        %v1041 = vrcp.pop %v932
        %v1042 = vrcp.pop %v935
        %v1043 = vrcp.pop %v938
        %v1044 = vrcp.pop %v941
        %v1045 = vrcp.pop %v944
        %v1046 = vmul.f32 %v1008, %v1038
        %v1047 = vmul.f32 %v1011, %v1039
        %v1048 = vmul.f32 %v1016, %v1040
        %v1049 = vmul.f32 %v1019, %v1041
        %v1050 = vmul.f32 %v1024, %v1042
        %v1051 = vmul.f32 %v1027, %v1043
        %v1052 = vmul.f32 %v1032, %v1044
        %v1053 = vmul.f32 %v1035, %v1045
        %1062 = vrot.lane.b32.xlu0 %v1046, 8
        %v1063 = vpop.permute.xlu0 %1062
        %1064 = vrot.lane.b32.xlu0 %v1047, 8
        %v1065 = vpop.permute.xlu0 %1064
        %1066 = vrot.lane.b32.xlu0 %v1048, 8
        %v1067 = vpop.permute.xlu0 %1066
        %1068 = vrot.lane.b32.xlu0 %v1049, 8
        %v1069 = vpop.permute.xlu0 %1068
        %1070 = vrot.lane.b32.xlu0 %v1050, 8
        %v1071 = vpop.permute.xlu0 %1070
        %1072 = vrot.lane.b32.xlu0 %v1051, 8
        %v1073 = vpop.permute.xlu0 %1072
        %1074 = vrot.lane.b32.xlu0 %v1052, 8
        %v1075 = vpop.permute.xlu0 %1074
        %1076 = vrot.lane.b32.xlu0 %v1053, 8
        %v1077 = vpop.permute.xlu0 %1076
        %v1086 = vsel %vm480, %v752, %v1063
        %v1087 = vsel %vm480, %v753, %v1065
        %v1088 = vsel %vm480, %v754, %v1067
        %v1089 = vsel %vm480, %v755, %v1069
        %v1090 = vsel %vm480, %v756, %v1071
        %v1091 = vsel %vm480, %v757, %v1073
        %v1092 = vsel %vm480, %v758, %v1075
        %v1093 = vsel %vm480, %v759, %v1077
        %v1094 = vpack.c.bf16 %v1087, %v1086
        %v1095 = vpack.c.bf16 %v1089, %v1088
        %v1096 = vpack.c.bf16 %v1091, %v1090
        %v1097 = vpack.c.bf16 %v1093, %v1092
        %v1098 = vld [vmem:[%s5] sm:$0xf]
        %v1099 = vld [vmem:[%s5 + $0x4] sm:$0xf]
        %v1100 = vld [vmem:[%s6] sm:$0x1]
        %v1102 = vlaneseq
        %v1103 = vshrl.u32 %v1102, 7
        %v1104 = vsub.s32 0, %v1103
        %v1105 = vrot.slane %v1100, %v1104
        %v1109 = vunpack.c.l.b16 %v1098
        %v1110 = vunpack.c.l.b16 %v1099
        %v1111 = vpack.c.b16 %v1110, %v1109
        %v1114 = vsel %vm386, %v1094, 0
        %v1117 = vsel %vm386, %v1095, 0
        %v1120 = vsel %vm386, %v1096, 0
        %v1123 = vsel %vm386, %v1097, 0
        %1125 = vmatprep.subr.bf16.mxu0 0
        %1126 = vmatpush1.bf16.msra.mxu0 %v1111
        %1127 = vmatprep.subr.bf16.mxu0 0
        %1128 = vmatpush1.bf16.msra.mxu0 0
        %1129 = vmatprep.subr.bf16.mxu0 0
        %1130 = vmatpush1.bf16.msra.mxu0 0
        %1131 = vmatprep.subr.bf16.mxu0 0
        %1132 = vmatpush1.bf16.msra.mxu0 0
        %1133 = vmatprep.subr.bf16.mxu0 0
        %1134 = vmatpush1.bf16.msra.mxu0 0
        %1135 = vmatprep.subr.bf16.mxu0 0
        %1136 = vmatpush1.bf16.msra.mxu0 0
        %1137 = vmatprep.subr.bf16.mxu0 0
        %1138 = vmatpush1.bf16.msra.mxu0 0
        %1139 = vmatprep.subr.bf16.mxu0 0
        %1140 = vmatpush1.bf16.msra.mxu0 0
        %1141 = vmatprep.subr.bf16.mxu0 0
        %1142 = vmatpush1.bf16.msra.mxu0 0
        %1143 = vmatprep.subr.bf16.mxu0 0
        %1144 = vmatpush1.bf16.msra.mxu0 0
        %1145 = vmatprep.subr.bf16.mxu0 0
        %1146 = vmatpush1.bf16.msra.mxu0 0
        %1147 = vmatprep.subr.bf16.mxu0 0
        %1148 = vmatpush1.bf16.msra.mxu0 0
        %1149 = vmatprep.subr.bf16.mxu0 0
        %1150 = vmatpush1.bf16.msra.mxu0 0
        %1151 = vmatprep.subr.bf16.mxu0 0
        %1152 = vmatpush1.bf16.msra.mxu0 0
        %1153 = vmatprep.subr.bf16.mxu0 0
        %1154 = vmatpush1.bf16.msra.mxu0 0
        %1155 = vmatprep.subr.bf16.mxu0 0
        %1156 = vmatpush1.bf16.msra.mxu0 0
        %1157 = vmatprep.mubr.bf16.mxu0 0
        %1158 = vmatmul.mubr.bf16.gmra.mrb[0].mxu0 %v1114
        %v1159 = vpop.f32.mrb[0].mxu0
        %v1160 = vadd.f32 %v1105, %v1159
        %v1161 = vpop.f32.mrb[0].mxu0
        %v1162 = vpop.f32.mrb[0].mxu0
        %v1163 = vadd.f32 %v1105, %v1162
        %v1164 = vpop.f32.mrb[0].mxu0
        %1165 = vmatprep.mubr.bf16.mxu0 0
        %1166 = vmatmul.mubr.bf16.gmra.mrb[0].mxu0 %v1117
        %v1167 = vpop.f32.mrb[0].mxu0
        %v1168 = vadd.f32 %v1105, %v1167
        %v1169 = vpop.f32.mrb[0].mxu0
        %v1170 = vpop.f32.mrb[0].mxu0
        %v1171 = vadd.f32 %v1105, %v1170
        %v1172 = vpop.f32.mrb[0].mxu0
        %1173 = vmatprep.mubr.bf16.mxu0 0
        %1174 = vmatmul.mubr.bf16.gmra.mrb[0].mxu0 %v1120
        %v1175 = vpop.f32.mrb[0].mxu0
        %v1176 = vadd.f32 %v1105, %v1175
        %v1177 = vpop.f32.mrb[0].mxu0
        %v1178 = vpop.f32.mrb[0].mxu0
        %v1179 = vadd.f32 %v1105, %v1178
        %v1180 = vpop.f32.mrb[0].mxu0
        %1181 = vmatprep.mubr.bf16.mxu0 0
        %1182 = vmatmul.mubr.bf16.gmra.mrb[0].mxu0 %v1123
        %v1183 = vpop.f32.mrb[0].mxu0
        %v1184 = vadd.f32 %v1105, %v1183
        %v1185 = vpop.f32.mrb[0].mxu0
        %v1186 = vpop.f32.mrb[0].mxu0
        %v1187 = vadd.f32 %v1105, %v1186
        %v1188 = vpop.f32.mrb[0].mxu0
        %1189 = vdwg.mxu0
        %v1190 = vld [vmem:[%s7] sm:$0x1]
        %v1192 = vlaneseq
        %v1193 = vshrl.u32 %v1192, 7
        %v1194 = vsub.s32 0, %v1193
        %v1195 = vrot.slane %v1190, %v1194
        %v1197 = vmul.f32 %v1195, %v1160
        %v1198 = vmul.f32 %v1195, %v1163
        %v1199 = vmul.f32 %v1195, %v1168
        %v1200 = vmul.f32 %v1195, %v1171
        %v1201 = vmul.f32 %v1195, %v1176
        %v1202 = vmul.f32 %v1195, %v1179
        %v1203 = vmul.f32 %v1195, %v1184
        %v1204 = vmul.f32 %v1195, %v1187
        %v1205 = vadd.f32 %v329, %v1197
        %v1206 = vadd.f32 %v330, %v1198
        %v1207 = vadd.f32 %v331, %v1199
        %v1208 = vadd.f32 %v332, %v1200
        %v1209 = vadd.f32 %v333, %v1201
        %v1210 = vadd.f32 %v334, %v1202
        %v1211 = vadd.f32 %v335, %v1203
        %v1212 = vadd.f32 %v336, %v1204
        %1213 = vst.msk [vmem:[%s326] sm:$0xff] %vm386, %v1205
        %1214 = vst.msk [vmem:[%s326 + $0x8] sm:$0xff] %vm386, %v1206
        %1215 = vst.msk [vmem:[%s326 + $0x10] sm:$0xff] %vm386, %v1207
        %1216 = vst.msk [vmem:[%s326 + $0x18] sm:$0xff] %vm386, %v1208
        %1217 = vst.msk [vmem:[%s326 + $0x20] sm:$0xff] %vm386, %v1209
        %1218 = vst.msk [vmem:[%s326 + $0x28] sm:$0xff] %vm386, %v1210
        %1219 = vst.msk [vmem:[%s326 + $0x30] sm:$0xff] %vm386, %v1211
        %1220 = vst.msk [vmem:[%s326 + $0x38] sm:$0xff] %vm386, %v1212
        %s1221 = smul.u32 8, %s22
        %p1222 = scmp.lt.s32.totalorder %s1221, 15
        %s1223 = scalar_select %p1222, %s1221, 15
        %s1224 = smul.addr %s1223, 8
        %s1225 = scalar_lea.vmem %s8, %s1224
        // Predicated region
        $region57: #{transformer_encoder_convlike.2} parent=51 // pred_check
          %p1226 = pneg %p213
        $region58: #{transformer_encoder_convlike.2} parent=51 // pred_check_branch
          %1228 = sbr.rel (%p1226) target = $region60
        $region59: #{transformer_encoder_convlike.2} parent=51 // pred_region
          %s1229 = smul.u32 8, %s22
        $region60: #{transformer_encoder_convlike.2} parent=51 // pred_fallthru
          _
      $region52: #{transformer_encoder_convlike.2} parent=5 // pred_fallthru
        _
      %p1230 = scmp.le.s32.totalorder 2, %s17
      // Predicated region
      $region61: #{transformer_encoder_convlike.2} parent=5 // pred_check
        %p1231 = pneg %p1230
      $region62: #{transformer_encoder_convlike.2} parent=5 // pred_check_branch
        %1233 = sbr.rel (%p1231) target = $region64
      $region63: #{transformer_encoder_convlike.2} parent=5 // pred_region
        %s1234 = ssub.s32 %s17, 2
        // Predicated region
        $region65: #{transformer_encoder_convlike.2} parent=63 // pred_check
          %p1235 = pneg %p219
        $region66: #{transformer_encoder_convlike.2} parent=63 // pred_check_branch
          %1237 = sbr.rel (%p1235) target = $region68
        $region67: #{transformer_encoder_convlike.2} parent=63 // pred_region
          %s1238 = smul.u32 8, %s23
          %p1239 = scmp.lt.s32.totalorder %s1238, 15
          %s1240 = scalar_select %p1239, %s1238, 15
          %s1241 = smul.addr %s1240, 8
          %s1242 = scalar_lea.vmem %s8, %s1241
        $region68: #{transformer_encoder_convlike.2} parent=63 // pred_fallthru
          _
      $region64: #{transformer_encoder_convlike.2} parent=5 // pred_fallthru
        _
    $region6: #{transformer_encoder_convlike.2} parent=1 // loop_footer
      %s21 = sadd.s32 1, %s17
    $region7: #{transformer_encoder_convlike.2} parent=1 // loop_footer_branch
      %16 = sbr.rel target = $region3
    $region8: #{transformer_encoder_convlike.2} parent=1 // loop_exit
      _
    %1243 = vsyncpa [#allocation3], 1
    %s1244 = scalar_lea.sflag [#allocation3], 1
    %1245 = vsyncpa %s1244, 1

</llo_original>
